<compile_context>
chip_gen: v7x
topology: tpu7x:2x2x1
jax: 0.10.0
libtpu: 0.0.40
codegen_flags: <defaults>
</compile_context>

<pallas_src>
import functools

import jax
import jax.numpy as jnp
import numpy as np
from jax import lax
from jax.experimental import pallas as pl
from jax.experimental.pallas import tpu as pltpu


def _round_up(x, m):
    return ((x + m - 1) // m) * m


def convt_sigmoid_kernel(bias_ref, x_ref, w_ref, o_ref, *, co_per, n, h):
    # bias_ref: (Cout,)            SMEM (scalar prefetch)
    # x_ref:    (N*H, CW_pad)      bf16 activations, shared across grid steps
    # w_ref:    (co_per, CW_pad, L) bf16 scatter-baked weights for this co block
    # o_ref:    (N, co_per, H, L)  f32 output tile; L = stride*Wp (lane-dense)
    g = pl.program_id(0)
    xs = x_ref[...]                                           # (N*H, CW_pad)
    l = o_ref.shape[-1]
    for c in range(co_per):                                   # unrolled, 7 dots
        acc = jnp.dot(xs, w_ref[c], preferred_element_type=jnp.float32)  # (N*H, L)
        b = bias_ref[g * co_per + c]
        o_ref[:, c, :, :] = jax.nn.sigmoid(acc + b).reshape(n, h, l)


def prepare_convt_weights(w, W, *, stride, K):
    """Pack ConvTranspose2d weight (Cin, Cout, K, K) into
    B[co, ci*W + w, kh*Wp + (w*stride + kw)] (bf16).  Call once per weight set."""
    assert stride >= K, "fused disjoint-scatter formulation requires stride >= kernel_size"
    Cin, Cout, Kh, Kw = w.shape
    assert Kh == K and Kw == K
    Wp = _round_up(W * stride, 128)          # lane-dense padded output width
    L = stride * Wp
    CW = Cin * W
    CW_pad = _round_up(CW, 8)

    w = w.astype(jnp.float32)
    cols = jnp.arange(W)[:, None] * stride + jnp.arange(K)[None, :]                   # (W, K)
    onehot = (cols[:, :, None] == jnp.arange(Wp)[None, None, :]).astype(jnp.float32)  # (W, K, Wp)
    # B_core[ci, co, w, kh, u] = sum_kw weight[ci, co, kh, kw] * [u == w*stride + kw]
    B_core = jnp.einsum('xokj,wju->xowku', w, onehot)                                 # (Cin,Cout,W,K,Wp)
    B_core = jnp.pad(B_core, ((0, 0), (0, 0), (0, 0), (0, stride - K), (0, 0)))       # kh: K -> stride
    B_core = jnp.transpose(B_core, (1, 0, 2, 3, 4)).reshape(Cout, CW, L)              # (Cout, Cin*W, L)
    if CW_pad > CW:
        B_core = jnp.pad(B_core, ((0, 0), (0, CW_pad - CW), (0, 0)))
    return B_core.astype(jnp.bfloat16)


def model_forward(x, B_packed, bias, *, stride, K):
    """x: (N, Cin, H, W) NCHW;  B_packed: (Cout, CW_pad, stride*Wp);  bias: (Cout,)."""
    N, Cin, H, W = x.shape
    Cout, CW_pad, L = B_packed.shape
    Wp = L // stride
    CW = Cin * W
    assert stride >= K and CW_pad >= CW and L == stride * Wp
    H_out = (H - 1) * stride + K
    W_out = (W - 1) * stride + K

    # (N, Cin, H, W) -> (N*H, Cin*W): fold batch into the matmul M dimension.
    x2 = jnp.transpose(x, (0, 2, 1, 3)).reshape(N * H, CW).astype(jnp.bfloat16)
    if CW_pad > CW:
        x2 = jnp.pad(x2, ((0, 0), (0, CW_pad - CW)))

    # Split Cout across a small parallel grid (keeps both v7x TCs busy; only 2
    # grid-step overheads on single-TC chips).
    co_blocks = 2 if Cout % 2 == 0 else 1
    co_per = Cout // co_blocks

    cost = pl.CostEstimate(
        flops=2 * (N * H) * Cout * CW_pad * L,
        transcendentals=N * H * Cout * L,
        bytes_accessed=2 * (N * H * CW_pad + Cout * CW_pad * L) + 4 * N * Cout * H * L,
    )

    kernel = functools.partial(convt_sigmoid_kernel, co_per=co_per, n=N, h=H)

    out4 = pl.pallas_call(
        kernel,
        out_shape=jax.ShapeDtypeStruct((N, Cout, H, L), jnp.float32),
        grid_spec=pltpu.PrefetchScalarGridSpec(
            num_scalar_prefetch=1,
            grid=(co_blocks,),
            in_specs=[
                # Activations: constant block index -> fetched once, stays resident.
                pl.BlockSpec((N * H, CW_pad), lambda g, b: (0, 0)),
                # Weights: one co block per grid step.
                pl.BlockSpec((co_per, CW_pad, L), lambda g, b: (g, 0, 0)),
            ],
            out_specs=pl.BlockSpec((N, co_per, H, L), lambda g, b: (0, g, 0, 0)),
        ),
        compiler_params=pltpu.CompilerParams(
            dimension_semantics=("parallel",)),
        cost_estimate=cost,
    )(bias.astype(jnp.float32), x2, B_packed)

    # (N, Cout, H, stride*Wp) -> (N, Cout, H*stride, Wp): free row-major reshape,
    # then one slice down to the true ConvTranspose2d output extent.
    out = out4.reshape(N, Cout, H * stride, Wp)
    return out[:, :, :H_out, :W_out]


def reference_forward(x, w, b, *, stride=7, K=5):
    # ConvTranspose2d == conv with lhs_dilation, spatially flipped kernel, swapped channels.
    w_conv = jnp.transpose(w, (1, 0, 2, 3))[:, :, ::-1, ::-1]  # (Cout, Cin, K, K)
    out = lax.conv_general_dilated(
        x.astype(jnp.float32), w_conv.astype(jnp.float32),
        window_strides=(1, 1),
        padding=[(K - 1, K - 1), (K - 1, K - 1)],
        lhs_dilation=(stride, stride),
        dimension_numbers=("NCHW", "OIHW", "NCHW"))
    return jax.nn.sigmoid(out + b[None, :, None, None].astype(jnp.float32))


if __name__ == "__main__":
    key = jax.random.PRNGKey(0)
    kx, kw, kb = jax.random.split(key, 3)

    # Small shapes consistent with the module: batch=2, Cin=3 (fixed), spatial 8x8.
    N, Cin, H, W = 2, 3, 8, 8
    Cout, K, stride = 14, 5, 7

    x = jax.random.normal(kx, (N, Cin, H, W), dtype=jnp.float32)
    # PyTorch-style uniform init scale for ConvTranspose2d.
    bound = 1.0 / np.sqrt(Cin * K * K)
    w = jax.random.uniform(kw, (Cin, Cout, K, K), minval=-bound, maxval=bound, dtype=jnp.float32)
    b = jax.random.uniform(kb, (Cout,), minval=-bound, maxval=bound, dtype=jnp.float32)

    # Weight packing hoisted out of the per-call hot path.
    B_packed = prepare_convt_weights(w, W, stride=stride, K=K)
    fwd = jax.jit(functools.partial(model_forward, stride=stride, K=K))

    out = jax.block_until_ready(fwd(x, B_packed, b))

    ref = jax.block_until_ready(reference_forward(x, w, b, stride=stride, K=K))
    assert out.shape == (N, Cout, (H - 1) * stride + K, (W - 1) * stride + K), out.shape
    np.testing.assert_allclose(np.asarray(out), np.asarray(ref), rtol=2e-2, atol=2e-2)

    print("KERNEL_OK")
</pallas_src>

<mosaic_0001>
module attributes {stable_mosaic.version = 11 : i64} {
  func.func @convt_sigmoid_kernel(%arg0: i32, %arg1: memref<14xf32, #tpu.memory_space<smem>>, %arg2: memref<16x24xbf16, #tpu.memory_space<vmem>>, %arg3: memref<7x24x896xbf16, #tpu.memory_space<vmem>>, %arg4: memref<2x7x8x896xf32, #tpu.memory_space<vmem>>) attributes {dimension_semantics = [#tpu.dimension_semantics<parallel>], iteration_bounds = array<i64: 2>, scalar_prefetch = 1 : i64, scratch_operands = 0 : i64, tpu.core_type = #tpu.core_type<tc>, window_params = [{pipeline_mode = #tpu.pipeline_mode<synchronous>, transform_indices = @transform_0, window_bounds = array<i64: 16, 24>}, {transform_indices = @transform_1, window_bounds = array<i64: 7, 24, 896>}, {transform_indices = @transform_2, window_bounds = array<i64: 2, 7, 8, 896>}]} {
    %c0 = arith.constant 0 : index
    %c0_0 = arith.constant 0 : index
    %0 = vector.load %arg2[%c0, %c0_0] : memref<16x24xbf16, #tpu.memory_space<vmem>>, vector<16x24xbf16>
    %c0_1 = arith.constant 0 : index
    %c0_2 = arith.constant 0 : index
    %c0_3 = arith.constant 0 : index
    %1 = vector.load %arg3[%c0_1, %c0_2, %c0_3] : memref<7x24x896xbf16, #tpu.memory_space<vmem>>, vector<1x24x896xbf16>
    %2 = vector.shape_cast %1 : vector<1x24x896xbf16> to vector<24x896xbf16>
    %cst = arith.constant dense<0.000000e+00> : vector<16x896xf32>
    %3 = tpu.matmul %0, %2, %cst {dimension_numbers = #tpu.dot_dimension_numbers<[1], [0], [0], [1], [0, 0, 1, 1], [], []>} : vector<16x24xbf16>, vector<24x896xbf16>, vector<16x896xf32> -> vector<16x896xf32>
    %c7_i32 = arith.constant 7 : i32
    %4 = arith.muli %arg0, %c7_i32 : i32
    %c0_i32 = arith.constant 0 : i32
    %5 = arith.addi %4, %c0_i32 : i32
    %6 = arith.index_cast %5 : i32 to index
    %7 = memref.load %arg1[%6] : memref<14xf32, #tpu.memory_space<smem>>
    %8 = vector.broadcast %7 : f32 to vector<16x896xf32>
    %9 = arith.addf %3, %8 : vector<16x896xf32>
    %10 = arith.negf %9 : vector<16x896xf32>
    %11 = math.exp %10 : vector<16x896xf32>
    %cst_4 = arith.constant 1.000000e+00 : f32
    %12 = vector.broadcast %cst_4 : f32 to vector<16x896xf32>
    %13 = arith.addf %12, %11 : vector<16x896xf32>
    %14 = arith.divf %12, %13 : vector<16x896xf32>
    %15 = vector.shape_cast %14 : vector<16x896xf32> to vector<2x8x896xf32>
    %c0_5 = arith.constant 0 : index
    %c0_6 = arith.constant 0 : index
    %c0_7 = arith.constant 0 : index
    %c0_8 = arith.constant 0 : index
    %16 = vector.load %arg4[%c0_5, %c0_6, %c0_7, %c0_8] : memref<2x7x8x896xf32, #tpu.memory_space<vmem>>, vector<2x1x8x896xf32>
    %17 = vector.shape_cast %16 : vector<2x1x8x896xf32> to vector<2x8x896xf32>
    %18 = vector.shape_cast %15 : vector<2x8x896xf32> to vector<2x1x8x896xf32>
    tpu.vector_store %arg4[%c0_5, %c0_6, %c0_7, %c0_8], %18 {strides = array<i32>} : memref<2x7x8x896xf32, #tpu.memory_space<vmem>>, vector<2x1x8x896xf32>,
    %c1 = arith.constant 1 : index
    %c0_9 = arith.constant 0 : index
    %c0_10 = arith.constant 0 : index
    %19 = vector.load %arg3[%c1, %c0_9, %c0_10] : memref<7x24x896xbf16, #tpu.memory_space<vmem>>, vector<1x24x896xbf16>
    %20 = vector.shape_cast %19 : vector<1x24x896xbf16> to vector<24x896xbf16>
    %cst_11 = arith.constant dense<0.000000e+00> : vector<16x896xf32>
    %21 = tpu.matmul %0, %20, %cst_11 {dimension_numbers = #tpu.dot_dimension_numbers<[1], [0], [0], [1], [0, 0, 1, 1], [], []>} : vector<16x24xbf16>, vector<24x896xbf16>, vector<16x896xf32> -> vector<16x896xf32>
    %c7_i32_12 = arith.constant 7 : i32
    %22 = arith.muli %arg0, %c7_i32_12 : i32
    %c1_i32 = arith.constant 1 : i32
    %23 = arith.addi %22, %c1_i32 : i32
    %24 = arith.index_cast %23 : i32 to index
    %25 = memref.load %arg1[%24] : memref<14xf32, #tpu.memory_space<smem>>
    %26 = vector.broadcast %25 : f32 to vector<16x896xf32>
    %27 = arith.addf %21, %26 : vector<16x896xf32>
    %28 = arith.negf %27 : vector<16x896xf32>
    %29 = math.exp %28 : vector<16x896xf32>
    %cst_13 = arith.constant 1.000000e+00 : f32
    %30 = vector.broadcast %cst_13 : f32 to vector<16x896xf32>
    %31 = arith.addf %30, %29 : vector<16x896xf32>
    %32 = arith.divf %30, %31 : vector<16x896xf32>
    %33 = vector.shape_cast %32 : vector<16x896xf32> to vector<2x8x896xf32>
    %c0_14 = arith.constant 0 : index
    %c1_15 = arith.constant 1 : index
    %c0_16 = arith.constant 0 : index
    %c0_17 = arith.constant 0 : index
    %34 = vector.load %arg4[%c0_14, %c1_15, %c0_16, %c0_17] : memref<2x7x8x896xf32, #tpu.memory_space<vmem>>, vector<2x1x8x896xf32>
    %35 = vector.shape_cast %34 : vector<2x1x8x896xf32> to vector<2x8x896xf32>
    %36 = vector.shape_cast %33 : vector<2x8x896xf32> to vector<2x1x8x896xf32>
    tpu.vector_store %arg4[%c0_14, %c1_15, %c0_16, %c0_17], %36 {strides = array<i32>} : memref<2x7x8x896xf32, #tpu.memory_space<vmem>>, vector<2x1x8x896xf32>,
    %c2 = arith.constant 2 : index
    %c0_18 = arith.constant 0 : index
    %c0_19 = arith.constant 0 : index
    %37 = vector.load %arg3[%c2, %c0_18, %c0_19] : memref<7x24x896xbf16, #tpu.memory_space<vmem>>, vector<1x24x896xbf16>
    %38 = vector.shape_cast %37 : vector<1x24x896xbf16> to vector<24x896xbf16>
    %cst_20 = arith.constant dense<0.000000e+00> : vector<16x896xf32>
    %39 = tpu.matmul %0, %38, %cst_20 {dimension_numbers = #tpu.dot_dimension_numbers<[1], [0], [0], [1], [0, 0, 1, 1], [], []>} : vector<16x24xbf16>, vector<24x896xbf16>, vector<16x896xf32> -> vector<16x896xf32>
    %c7_i32_21 = arith.constant 7 : i32
    %40 = arith.muli %arg0, %c7_i32_21 : i32
    %c2_i32 = arith.constant 2 : i32
    %41 = arith.addi %40, %c2_i32 : i32
    %42 = arith.index_cast %41 : i32 to index
    %43 = memref.load %arg1[%42] : memref<14xf32, #tpu.memory_space<smem>>
    %44 = vector.broadcast %43 : f32 to vector<16x896xf32>
    %45 = arith.addf %39, %44 : vector<16x896xf32>
    %46 = arith.negf %45 : vector<16x896xf32>
    %47 = math.exp %46 : vector<16x896xf32>
    %cst_22 = arith.constant 1.000000e+00 : f32
    %48 = vector.broadcast %cst_22 : f32 to vector<16x896xf32>
    %49 = arith.addf %48, %47 : vector<16x896xf32>
    %50 = arith.divf %48, %49 : vector<16x896xf32>
    %51 = vector.shape_cast %50 : vector<16x896xf32> to vector<2x8x896xf32>
    %c0_23 = arith.constant 0 : index
    %c2_24 = arith.constant 2 : index
    %c0_25 = arith.constant 0 : index
    %c0_26 = arith.constant 0 : index
    %52 = vector.load %arg4[%c0_23, %c2_24, %c0_25, %c0_26] : memref<2x7x8x896xf32, #tpu.memory_space<vmem>>, vector<2x1x8x896xf32>
    %53 = vector.shape_cast %52 : vector<2x1x8x896xf32> to vector<2x8x896xf32>
    %54 = vector.shape_cast %51 : vector<2x8x896xf32> to vector<2x1x8x896xf32>
    tpu.vector_store %arg4[%c0_23, %c2_24, %c0_25, %c0_26], %54 {strides = array<i32>} : memref<2x7x8x896xf32, #tpu.memory_space<vmem>>, vector<2x1x8x896xf32>,
    %c3 = arith.constant 3 : index
    %c0_27 = arith.constant 0 : index
    %c0_28 = arith.constant 0 : index
    %55 = vector.load %arg3[%c3, %c0_27, %c0_28] : memref<7x24x896xbf16, #tpu.memory_space<vmem>>, vector<1x24x896xbf16>
    %56 = vector.shape_cast %55 : vector<1x24x896xbf16> to vector<24x896xbf16>
    %cst_29 = arith.constant dense<0.000000e+00> : vector<16x896xf32>
    %57 = tpu.matmul %0, %56, %cst_29 {dimension_numbers = #tpu.dot_dimension_numbers<[1], [0], [0], [1], [0, 0, 1, 1], [], []>} : vector<16x24xbf16>, vector<24x896xbf16>, vector<16x896xf32> -> vector<16x896xf32>
    %c7_i32_30 = arith.constant 7 : i32
    %58 = arith.muli %arg0, %c7_i32_30 : i32
    %c3_i32 = arith.constant 3 : i32
    %59 = arith.addi %58, %c3_i32 : i32
    %60 = arith.index_cast %59 : i32 to index
    %61 = memref.load %arg1[%60] : memref<14xf32, #tpu.memory_space<smem>>
    %62 = vector.broadcast %61 : f32 to vector<16x896xf32>
    %63 = arith.addf %57, %62 : vector<16x896xf32>
    %64 = arith.negf %63 : vector<16x896xf32>
    %65 = math.exp %64 : vector<16x896xf32>
    %cst_31 = arith.constant 1.000000e+00 : f32
    %66 = vector.broadcast %cst_31 : f32 to vector<16x896xf32>
    %67 = arith.addf %66, %65 : vector<16x896xf32>
    %68 = arith.divf %66, %67 : vector<16x896xf32>
    %69 = vector.shape_cast %68 : vector<16x896xf32> to vector<2x8x896xf32>
    %c0_32 = arith.constant 0 : index
    %c3_33 = arith.constant 3 : index
    %c0_34 = arith.constant 0 : index
    %c0_35 = arith.constant 0 : index
    %70 = vector.load %arg4[%c0_32, %c3_33, %c0_34, %c0_35] : memref<2x7x8x896xf32, #tpu.memory_space<vmem>>, vector<2x1x8x896xf32>
    %71 = vector.shape_cast %70 : vector<2x1x8x896xf32> to vector<2x8x896xf32>
    %72 = vector.shape_cast %69 : vector<2x8x896xf32> to vector<2x1x8x896xf32>
    tpu.vector_store %arg4[%c0_32, %c3_33, %c0_34, %c0_35], %72 {strides = array<i32>} : memref<2x7x8x896xf32, #tpu.memory_space<vmem>>, vector<2x1x8x896xf32>,
    %c4 = arith.constant 4 : index
    %c0_36 = arith.constant 0 : index
    %c0_37 = arith.constant 0 : index
    %73 = vector.load %arg3[%c4, %c0_36, %c0_37] : memref<7x24x896xbf16, #tpu.memory_space<vmem>>, vector<1x24x896xbf16>
    %74 = vector.shape_cast %73 : vector<1x24x896xbf16> to vector<24x896xbf16>
    %cst_38 = arith.constant dense<0.000000e+00> : vector<16x896xf32>
    %75 = tpu.matmul %0, %74, %cst_38 {dimension_numbers = #tpu.dot_dimension_numbers<[1], [0], [0], [1], [0, 0, 1, 1], [], []>} : vector<16x24xbf16>, vector<24x896xbf16>, vector<16x896xf32> -> vector<16x896xf32>
    %c7_i32_39 = arith.constant 7 : i32
    %76 = arith.muli %arg0, %c7_i32_39 : i32
    %c4_i32 = arith.constant 4 : i32
    %77 = arith.addi %76, %c4_i32 : i32
    %78 = arith.index_cast %77 : i32 to index
    %79 = memref.load %arg1[%78] : memref<14xf32, #tpu.memory_space<smem>>
    %80 = vector.broadcast %79 : f32 to vector<16x896xf32>
    %81 = arith.addf %75, %80 : vector<16x896xf32>
    %82 = arith.negf %81 : vector<16x896xf32>
    %83 = math.exp %82 : vector<16x896xf32>
    %cst_40 = arith.constant 1.000000e+00 : f32
    %84 = vector.broadcast %cst_40 : f32 to vector<16x896xf32>
    %85 = arith.addf %84, %83 : vector<16x896xf32>
    %86 = arith.divf %84, %85 : vector<16x896xf32>
    %87 = vector.shape_cast %86 : vector<16x896xf32> to vector<2x8x896xf32>
    %c0_41 = arith.constant 0 : index
    %c4_42 = arith.constant 4 : index
    %c0_43 = arith.constant 0 : index
    %c0_44 = arith.constant 0 : index
    %88 = vector.load %arg4[%c0_41, %c4_42, %c0_43, %c0_44] : memref<2x7x8x896xf32, #tpu.memory_space<vmem>>, vector<2x1x8x896xf32>
    %89 = vector.shape_cast %88 : vector<2x1x8x896xf32> to vector<2x8x896xf32>
    %90 = vector.shape_cast %87 : vector<2x8x896xf32> to vector<2x1x8x896xf32>
    tpu.vector_store %arg4[%c0_41, %c4_42, %c0_43, %c0_44], %90 {strides = array<i32>} : memref<2x7x8x896xf32, #tpu.memory_space<vmem>>, vector<2x1x8x896xf32>,
    %c5 = arith.constant 5 : index
    %c0_45 = arith.constant 0 : index
    %c0_46 = arith.constant 0 : index
    %91 = vector.load %arg3[%c5, %c0_45, %c0_46] : memref<7x24x896xbf16, #tpu.memory_space<vmem>>, vector<1x24x896xbf16>
    %92 = vector.shape_cast %91 : vector<1x24x896xbf16> to vector<24x896xbf16>
    %cst_47 = arith.constant dense<0.000000e+00> : vector<16x896xf32>
    %93 = tpu.matmul %0, %92, %cst_47 {dimension_numbers = #tpu.dot_dimension_numbers<[1], [0], [0], [1], [0, 0, 1, 1], [], []>} : vector<16x24xbf16>, vector<24x896xbf16>, vector<16x896xf32> -> vector<16x896xf32>
    %c7_i32_48 = arith.constant 7 : i32
    %94 = arith.muli %arg0, %c7_i32_48 : i32
    %c5_i32 = arith.constant 5 : i32
    %95 = arith.addi %94, %c5_i32 : i32
    %96 = arith.index_cast %95 : i32 to index
    %97 = memref.load %arg1[%96] : memref<14xf32, #tpu.memory_space<smem>>
    %98 = vector.broadcast %97 : f32 to vector<16x896xf32>
    %99 = arith.addf %93, %98 : vector<16x896xf32>
    %100 = arith.negf %99 : vector<16x896xf32>
    %101 = math.exp %100 : vector<16x896xf32>
    %cst_49 = arith.constant 1.000000e+00 : f32
    %102 = vector.broadcast %cst_49 : f32 to vector<16x896xf32>
    %103 = arith.addf %102, %101 : vector<16x896xf32>
    %104 = arith.divf %102, %103 : vector<16x896xf32>
    %105 = vector.shape_cast %104 : vector<16x896xf32> to vector<2x8x896xf32>
    %c0_50 = arith.constant 0 : index
    %c5_51 = arith.constant 5 : index
    %c0_52 = arith.constant 0 : index
    %c0_53 = arith.constant 0 : index
    %106 = vector.load %arg4[%c0_50, %c5_51, %c0_52, %c0_53] : memref<2x7x8x896xf32, #tpu.memory_space<vmem>>, vector<2x1x8x896xf32>
    %107 = vector.shape_cast %106 : vector<2x1x8x896xf32> to vector<2x8x896xf32>
    %108 = vector.shape_cast %105 : vector<2x8x896xf32> to vector<2x1x8x896xf32>
    tpu.vector_store %arg4[%c0_50, %c5_51, %c0_52, %c0_53], %108 {strides = array<i32>} : memref<2x7x8x896xf32, #tpu.memory_space<vmem>>, vector<2x1x8x896xf32>,
    %c6 = arith.constant 6 : index
    %c0_54 = arith.constant 0 : index
    %c0_55 = arith.constant 0 : index
    %109 = vector.load %arg3[%c6, %c0_54, %c0_55] : memref<7x24x896xbf16, #tpu.memory_space<vmem>>, vector<1x24x896xbf16>
    %110 = vector.shape_cast %109 : vector<1x24x896xbf16> to vector<24x896xbf16>
    %cst_56 = arith.constant dense<0.000000e+00> : vector<16x896xf32>
    %111 = tpu.matmul %0, %110, %cst_56 {dimension_numbers = #tpu.dot_dimension_numbers<[1], [0], [0], [1], [0, 0, 1, 1], [], []>} : vector<16x24xbf16>, vector<24x896xbf16>, vector<16x896xf32> -> vector<16x896xf32>
    %c7_i32_57 = arith.constant 7 : i32
    %112 = arith.muli %arg0, %c7_i32_57 : i32
    %c6_i32 = arith.constant 6 : i32
    %113 = arith.addi %112, %c6_i32 : i32
    %114 = arith.index_cast %113 : i32 to index
    %115 = memref.load %arg1[%114] : memref<14xf32, #tpu.memory_space<smem>>
    %116 = vector.broadcast %115 : f32 to vector<16x896xf32>
    %117 = arith.addf %111, %116 : vector<16x896xf32>
    %118 = arith.negf %117 : vector<16x896xf32>
    %119 = math.exp %118 : vector<16x896xf32>
    %cst_58 = arith.constant 1.000000e+00 : f32
    %120 = vector.broadcast %cst_58 : f32 to vector<16x896xf32>
    %121 = arith.addf %120, %119 : vector<16x896xf32>
    %122 = arith.divf %120, %121 : vector<16x896xf32>
    %123 = vector.shape_cast %122 : vector<16x896xf32> to vector<2x8x896xf32>
    %c0_59 = arith.constant 0 : index
    %c6_60 = arith.constant 6 : index
    %c0_61 = arith.constant 0 : index
    %c0_62 = arith.constant 0 : index
    %124 = vector.load %arg4[%c0_59, %c6_60, %c0_61, %c0_62] : memref<2x7x8x896xf32, #tpu.memory_space<vmem>>, vector<2x1x8x896xf32>
    %125 = vector.shape_cast %124 : vector<2x1x8x896xf32> to vector<2x8x896xf32>
    %126 = vector.shape_cast %123 : vector<2x8x896xf32> to vector<2x1x8x896xf32>
    tpu.vector_store %arg4[%c0_59, %c6_60, %c0_61, %c0_62], %126 {strides = array<i32>} : memref<2x7x8x896xf32, #tpu.memory_space<vmem>>, vector<2x1x8x896xf32>,
    return
  }
  func.func @transform_0(%arg0: i32, %arg1: memref<14xf32, #tpu.memory_space<smem>>) -> (i32, i32) {
    %c0_i32 = arith.constant 0 : i32
    %c0_i32_0 = arith.constant 0 : i32
    %c0_i32_1 = arith.constant 0 : i32
    return %c0_i32, %c0_i32_0 : i32, i32
  }
  func.func @transform_1(%arg0: i32, %arg1: memref<14xf32, #tpu.memory_space<smem>>) -> (i32, i32, i32) {
    %c0_i32 = arith.constant 0 : i32
    %c0_i32_0 = arith.constant 0 : i32
    %c0_i32_1 = arith.constant 0 : i32
    return %arg0, %c0_i32, %c0_i32_0 : i32, i32, i32
  }
  func.func @transform_2(%arg0: i32, %arg1: memref<14xf32, #tpu.memory_space<smem>>) -> (i32, i32, i32, i32) {
    %c0_i32 = arith.constant 0 : i32
    %c0_i32_0 = arith.constant 0 : i32
    %c0_i32_1 = arith.constant 0 : i32
    %c0_i32_2 = arith.constant 0 : i32
    return %c0_i32, %arg0, %c0_i32_0, %c0_i32_1 : i32, i32, i32, i32
  }
}

</mosaic_0001>

<llo_original>
// kernel: model_forward.1
$region0: #{model_forward.1}
  #allocation0 [shape = 'u32[]', space=smem, size = 0x4, offset = 0x4, fixed_abs, tag = 'smem constant byte address 0x4 - core index']
  #allocation1 [shape = 'u32[144,128]{1,0:T(1,128)}', space=vmem, size = 0x12000, scoped, tag = 'internal scratch']
  #allocation2 [shape = 's32[1]{0}', space=sflag, size = 0x4, scoped, tag = 'scoped memory for model_forward.1']
  #allocation3 [shape = 'u8[512]{0}', space=smem, size = 0x200, scoped, tag = 'prefetched SMEM operand 0']
  %s0 = inlined_call_operand.vmem [shape: f32[14], index: 0, kind: input, shape index: {}]
  %s1 = inlined_call_operand.vmem [shape: bf16[16,24], index: 1, kind: input, shape index: {}]
  %s2 = inlined_call_operand.hbm [shape: bf16[14,24,896], index: 2, kind: input, shape index: {}]
  %s3 = inlined_call_operand.vmem [shape: f32[2,14,8,896], index: 3, kind: output, shape index: {}]
  %s4 = sld [smem:[#allocation0]]
  $region64: #{model_forward.1} parent=0
    _
  %s6 = ssub.s32 1, %s4
  %s7 = scalar_select 0, %s6, %s4
  %s8 = sshll.u32 %s0, 4
  %s9 = int_to_ptr.vmem [resolvable:$true] %s8
  %11 = dma.vmem_to_smem %s9, 16, [#allocation3], [#allocation2]
  %12 = dma.done [#allocation2], 16
  %13 = sfence
  $region1: #{model_forward.1} parent=0
    #allocation4 [shape = 'u8[602112]{0}', space=vmem, size = 0x93000, scoped, tag = 'input window, operand 2']
    #allocation5 [shape = 's32[2]{0}', space=sflag, size = 0x8, scoped, tag = 'scoped memory for model_forward.1']
    #allocation6 [shape = 'u8[802816]{0}', space=vmem, size = 0xc4000, scoped, tag = 'output window, operand 0']
    %14 = vsyncpa [#allocation5], 0
    %s15 = scalar_lea.sflag [#allocation5], 1
    %16 = vsyncpa %s15, 0
    loop: start=0, step=1, limit=4
    $region2: #{model_forward.1} parent=1 // loop_pre_header
      _
    $region3: #{model_forward.1} parent=1 // loop_header
      %s18 = sphi 0, %s22
      %p19 = scmp.ge.s32.totalorder %s18, 4
      %s26 = sphi 0, %s26
      %s28 = sphi 0, %s26
      %s29 = sphi 0, %s28
      %s43 = sphi 0, %s29
      %s49 = sphi 0, %s51
      %s52 = sphi 0, %s49
      %s53 = sphi 0, %s52
      %s69 = sphi 0, %s53
      %s75 = sphi 0, %s77
      %s78 = sphi 0, %s75
      %s79 = sphi 0, %s78
      %s95 = sphi 0, %s79
    $region4: #{model_forward.1} parent=1 // loop_header_branch
      %21 = sbr.rel (%p19) target = $region8
    $region5: #{model_forward.1} parent=1 // loop_body
      %s23 = ssub.s32 %s18, 1
      %s24 = ssub.s32 %s18, 2
      %s25 = sadd.s32 %s18, 1
      %s27 = sadd.s32 %s26, 1
      %p30 = scmp.eq.s32.totalorder %s18, 1
      %p31 = scmp.ne.s32.totalorder %s26, %s28
      %p32 = scmp.eq.s32.totalorder %s18, 0
      %p33 = por %p31, %p32
      %p34 = scmp.ne.s32.totalorder %s26, %s28
      %p35 = scmp.eq.s32.totalorder %s23, 1
      %p36 = por %p34, %p35
      %p37 = scmp.ne.s32.totalorder %s28, %s29
      %p38 = scmp.eq.s32.totalorder %s23, 0
      %p39 = por %p37, %p38
      %p40 = scmp.ne.s32.totalorder %s28, %s29
      %p41 = scmp.eq.s32.totalorder %s24, 1
      %p42 = por %p40, %p41
      %p44 = scmp.ne.s32.totalorder %s29, %s43
      %p45 = scmp.eq.s32.totalorder %s24, 0
      %p46 = por %p44, %p45
      %s47 = ssub.s32 %s18, %s25
      %p48 = scmp.eq.s32.totalorder %s47, 0
      %s50 = sadd.s32 %s49, 1
      %s51 = scalar_select %p48, %s49, %s50
      %p54 = pneg %p48
      %p55 = scmp.eq.s32.totalorder %s18, 1
      %p56 = por %p54, %p55
      %p57 = scmp.ne.s32.totalorder %s49, %s52
      %p58 = scmp.eq.s32.totalorder %s18, 0
      %p59 = por %p57, %p58
      %p60 = scmp.ne.s32.totalorder %s49, %s52
      %p61 = scmp.eq.s32.totalorder %s23, 1
      %p62 = por %p60, %p61
      %p63 = scmp.ne.s32.totalorder %s52, %s53
      %p64 = scmp.eq.s32.totalorder %s23, 0
      %p65 = por %p63, %p64
      %p66 = scmp.ne.s32.totalorder %s52, %s53
      %p67 = scmp.eq.s32.totalorder %s24, 1
      %p68 = por %p66, %p67
      %p70 = scmp.ne.s32.totalorder %s53, %s69
      %p71 = scmp.eq.s32.totalorder %s24, 0
      %p72 = por %p70, %p71
      %s73 = ssub.s32 %s18, %s25
      %p74 = scmp.eq.s32.totalorder %s73, 0
      %s76 = sadd.s32 %s75, 1
      %s77 = scalar_select %p74, %s75, %s76
      %p80 = pneg %p74
      %p81 = scmp.eq.s32.totalorder %s18, 1
      %p82 = por %p80, %p81
      %p83 = scmp.ne.s32.totalorder %s75, %s78
      %p84 = scmp.eq.s32.totalorder %s18, 0
      %p85 = por %p83, %p84
      %p86 = scmp.ne.s32.totalorder %s75, %s78
      %p87 = scmp.eq.s32.totalorder %s23, 1
      %p88 = por %p86, %p87
      %p89 = scmp.ne.s32.totalorder %s78, %s79
      %p90 = scmp.eq.s32.totalorder %s23, 0
      %p91 = por %p89, %p90
      %p92 = scmp.ne.s32.totalorder %s78, %s79
      %p93 = scmp.eq.s32.totalorder %s24, 1
      %p94 = por %p92, %p93
      %p96 = scmp.ne.s32.totalorder %s79, %s95
      %p97 = scmp.eq.s32.totalorder %s24, 0
      %p98 = por %p96, %p97
      %p99 = scmp.le.s32.totalorder 1, %s18
      %p100 = scmp.lt.s32.totalorder %s18, 3
      %p101 = pnand %p99, %p100
      %p102 = pneg %p101
      // Predicated region
      $region9: #{model_forward.1} parent=5 // pred_check
        _
      $region10: #{model_forward.1} parent=5 // pred_check_branch
        %104 = sbr.rel (%p101) target = $region12
      $region11: #{model_forward.1} parent=5 // pred_region
        %s105 = ssub.s32 %s18, 1
        // Predicated region
        $region13: #{model_forward.1} parent=11 // pred_check
          %p106 = pneg %p39
        $region14: #{model_forward.1} parent=11 // pred_check_branch
          %108 = sbr.rel (%p106) target = $region16
        $region15: #{model_forward.1} parent=11 // pred_region
          _
        $region16: #{model_forward.1} parent=11 // pred_fallthru
          _
      $region12: #{model_forward.1} parent=5 // pred_fallthru
        _
      %p109 = scmp.lt.s32.totalorder %s18, 2
      // Predicated region
      $region17: #{model_forward.1} parent=5 // pred_check
        %p110 = pneg %p109
      $region18: #{model_forward.1} parent=5 // pred_check_branch
        %112 = sbr.rel (%p110) target = $region20
      $region19: #{model_forward.1} parent=5 // pred_region
        // Predicated region
        $region21: #{model_forward.1} parent=19 // pred_check
          %p113 = pneg %p59
        $region22: #{model_forward.1} parent=19 // pred_check_branch
          %115 = sbr.rel (%p113) target = $region24
        $region23: #{model_forward.1} parent=19 // pred_region
          %s116 = sand.u32 %s49, 1
          %s117 = scalar_lea.sflag [#allocation5], %s116
          %s118 = sand.u32 %s49, 1
          %s119 = smul.addr %s118, 588
          %s120 = scalar_lea.vmem [#allocation4], %s119
          %s121 = smul.u32 7, %s18
          %s123 = ssub.s32 9408, 9408
          %124 = vsyncadd %s117, %s123
          %s125 = smul.addr %s121, 21
          %s126 = smul.addr %s125, 64
          %s127 = scalar_lea.hbm %s2, %s126
          %s128 = sshll.u32 %s120, 4
          %s129 = int_to_ptr.vmem [resolvable:$true] %s128
          %134 = dma.hbm_to_vmem [thread:$0]  %s127, 9408, %s129, %s117, 448, 448, 28
        $region24: #{model_forward.1} parent=19 // pred_fallthru
          _
      $region20: #{model_forward.1} parent=5 // pred_fallthru
        _
      %p135 = scmp.le.s32.totalorder 1, %s18
      %p136 = scmp.lt.s32.totalorder %s18, 3
      %p137 = pnand %p135, %p136
      %p138 = pneg %p137
      // Predicated region
      $region25: #{model_forward.1} parent=5 // pred_check
        _
      $region26: #{model_forward.1} parent=5 // pred_check_branch
        %140 = sbr.rel (%p137) target = $region28
      $region27: #{model_forward.1} parent=5 // pred_region
        %s141 = ssub.s32 %s18, 1
        %s142 = sand.u32 %s52, 1
        %s143 = scalar_lea.sflag [#allocation5], %s142
        %s144 = sand.u32 %s52, 1
        %s145 = smul.addr %s144, 588
        %s146 = scalar_lea.vmem [#allocation4], %s145
        // Predicated region
        $region29: #{model_forward.1} parent=27 // pred_check
          %p147 = pneg %p65
        $region30: #{model_forward.1} parent=27 // pred_check_branch
          %149 = sbr.rel (%p147) target = $region32
        $region31: #{model_forward.1} parent=27 // pred_region
          %150 = dma.done %s143, 9408
        $region32: #{model_forward.1} parent=27 // pred_fallthru
          _
        %p151 = pneg %p39
        %p152 = pneg %p36
        %s153 = sand.u32 %s52, 1
        %s154 = scalar_lea.sflag [#allocation5], %s153
        %s155 = sand.u32 %s52, 1
        %s156 = smul.addr %s155, 588
        %s157 = scalar_lea.vmem [#allocation4], %s156
        %p158 = pneg %p65
        %p159 = pneg %p62
        %p160 = pneg %p91
        %p161 = pneg %p88
        %s162 = sand.u32 %s78, 1
        %s163 = sand.u32 %s78, 1
        %s164 = smul.addr %s163, 784
        %s165 = scalar_lea.vmem [#allocation6], %s164
        %s166 = smul.u32 7, %s23
        %s167 = smul.u32 7, %s23
        %v169 = vld [vmem:[%s1] sm:$0xf]
        %v170 = vld [vmem:[%s1 + $0x4] sm:$0xf]
        %v171 = vld [vmem:[%s146] sm:$0xff]
        %v172 = vld [vmem:[%s146 + $0x8] sm:$0xff]
        %v173 = vld [vmem:[%s146 + $0x10] sm:$0xff]
        %v174 = vld [vmem:[%s146 + $0x18] sm:$0xf]
        %v175 = vld [vmem:[%s146 + $0x1c] sm:$0xff]
        %v176 = vld [vmem:[%s146 + $0x24] sm:$0xff]
        %v177 = vld [vmem:[%s146 + $0x2c] sm:$0xff]
        %v178 = vld [vmem:[%s146 + $0x34] sm:$0xf]
        %v179 = vld [vmem:[%s146 + $0x38] sm:$0xff]
        %v180 = vld [vmem:[%s146 + $0x40] sm:$0xff]
        %v181 = vld [vmem:[%s146 + $0x48] sm:$0xff]
        %v182 = vld [vmem:[%s146 + $0x50] sm:$0xf]
        %s183 = smul.u32 %s23, 7
        %s184 = sld [smem:[#allocation3 + %s183]]
        %v185 = vstv %s184
        %v188 = vunpack.c.l.b16 %v169
        %v189 = vunpack.c.l.b16 %v170
        %v190 = vpack.c.b16 %v189, %v188
        %v203 = vunpack.c.l.b16 %v171
        %v204 = vunpack.c.h.b16 %v171
        %v205 = vunpack.c.l.b16 %v172
        %v206 = vunpack.c.h.b16 %v172
        %v207 = vunpack.c.l.b16 %v173
        %v208 = vunpack.c.h.b16 %v173
        %v209 = vunpack.c.l.b16 %v174
        %v210 = vunpack.c.l.b16 %v175
        %v211 = vunpack.c.h.b16 %v175
        %v212 = vunpack.c.l.b16 %v176
        %v213 = vunpack.c.h.b16 %v176
        %v214 = vunpack.c.l.b16 %v177
        %v215 = vunpack.c.h.b16 %v177
        %v216 = vunpack.c.l.b16 %v178
        %v217 = vunpack.c.l.b16 %v179
        %v218 = vunpack.c.h.b16 %v179
        %v219 = vunpack.c.l.b16 %v180
        %v220 = vunpack.c.h.b16 %v180
        %v221 = vunpack.c.l.b16 %v181
        %v222 = vunpack.c.h.b16 %v181
        %v223 = vunpack.c.l.b16 %v182
        %v224 = vpack.c.b16 %v210, %v203
        %v225 = vpack.c.b16 %v211, %v204
        %v226 = vpack.c.b16 %v212, %v205
        %v227 = vpack.c.b16 %v213, %v206
        %v228 = vpack.c.b16 %v214, %v207
        %v229 = vpack.c.b16 %v215, %v208
        %v230 = vpack.c.b16 %v216, %v209
        %v231 = vpack.c.b16 %v217, %v217
        %v232 = vpack.c.b16 %v218, %v218
        %v233 = vpack.c.b16 %v219, %v219
        %v234 = vpack.c.b16 %v220, %v220
        %v235 = vpack.c.b16 %v221, %v221
        %v236 = vpack.c.b16 %v222, %v222
        %v237 = vpack.c.b16 %v223, %v223
        %vm245 = vcmask 195584
        %v247 = vsel %vm245, %v190, 0
        %vm249 = vcmask 1043456
        %v251 = vsel %vm249, %v231, 0
        %v254 = vsel %vm249, %v232, 0
        %v257 = vsel %vm249, %v233, 0
        %v260 = vsel %vm249, %v234, 0
        %v263 = vsel %vm249, %v235, 0
        %v266 = vsel %vm249, %v236, 0
        %v269 = vsel %vm249, %v237, 0
        %271 = vmatprep.subr.bf16.mxu0 %v225
        %272 = vmatpush1.bf16.msra.mxu0 %v224
        %273 = vmatprep.subr.bf16.mxu0 %v254
        %274 = vmatpush1.bf16.msra.mxu0 %v251
        %275 = vmatprep.subr.bf16.mxu0 0
        %276 = vmatpush1.bf16.msra.mxu0 0
        %277 = vmatprep.subr.bf16.mxu0 0
        %278 = vmatpush1.bf16.msra.mxu0 0
        %279 = vmatprep.subr.bf16.mxu0 0
        %280 = vmatpush1.bf16.msra.mxu0 0
        %281 = vmatprep.subr.bf16.mxu0 0
        %282 = vmatpush1.bf16.msra.mxu0 0
        %283 = vmatprep.subr.bf16.mxu0 0
        %284 = vmatpush1.bf16.msra.mxu0 0
        %285 = vmatprep.subr.bf16.mxu0 0
        %286 = vmatpush1.bf16.msra.mxu0 0
        %287 = vmatprep.subr.bf16.mxu0 0
        %288 = vmatpush1.bf16.msra.mxu0 0
        %289 = vmatprep.subr.bf16.mxu0 0
        %290 = vmatpush1.bf16.msra.mxu0 0
        %291 = vmatprep.subr.bf16.mxu0 0
        %292 = vmatpush1.bf16.msra.mxu0 0
        %293 = vmatprep.subr.bf16.mxu0 0
        %294 = vmatpush1.bf16.msra.mxu0 0
        %295 = vmatprep.subr.bf16.mxu0 0
        %296 = vmatpush1.bf16.msra.mxu0 0
        %297 = vmatprep.subr.bf16.mxu0 0
        %298 = vmatpush1.bf16.msra.mxu0 0
        %299 = vmatprep.subr.bf16.mxu0 0
        %300 = vmatpush1.bf16.msra.mxu0 0
        %301 = vmatprep.subr.bf16.mxu0 0
        %302 = vmatpush1.bf16.msra.mxu0 0
        %303 = vmatprep.mubr.bf16.mxu0 0
        %304 = vmatmul.mubr.bf16.gmra.mrb[0].mxu0 %v247
        %v305 = vpop.f32.mrb[0].mxu0
        %v306 = vadd.f32 %v185, %v305
        %v307 = vpop.f32.mrb[0].mxu0
        %v308 = vadd.f32 %v185, %v307
        %v309 = vpop.f32.mrb[0].mxu0
        %v310 = vadd.f32 %v185, %v309
        %v311 = vpop.f32.mrb[0].mxu0
        %v312 = vadd.f32 %v185, %v311
        %313 = vdwg.mxu0
        %314 = vmatprep.subr.bf16.mxu0 %v227
        %315 = vmatpush1.bf16.msra.mxu0 %v226
        %316 = vmatprep.subr.bf16.mxu0 %v260
        %317 = vmatpush1.bf16.msra.mxu0 %v257
        %318 = vmatprep.subr.bf16.mxu0 0
        %319 = vmatpush1.bf16.msra.mxu0 0
        %320 = vmatprep.subr.bf16.mxu0 0
        %321 = vmatpush1.bf16.msra.mxu0 0
        %322 = vmatprep.subr.bf16.mxu0 0
        %323 = vmatpush1.bf16.msra.mxu0 0
        %324 = vmatprep.subr.bf16.mxu0 0
        %325 = vmatpush1.bf16.msra.mxu0 0
        %326 = vmatprep.subr.bf16.mxu0 0
        %327 = vmatpush1.bf16.msra.mxu0 0
        %328 = vmatprep.subr.bf16.mxu0 0
        %329 = vmatpush1.bf16.msra.mxu0 0
        %330 = vmatprep.subr.bf16.mxu0 0
        %331 = vmatpush1.bf16.msra.mxu0 0
        %332 = vmatprep.subr.bf16.mxu0 0
        %333 = vmatpush1.bf16.msra.mxu0 0
        %334 = vmatprep.subr.bf16.mxu0 0
        %335 = vmatpush1.bf16.msra.mxu0 0
        %336 = vmatprep.subr.bf16.mxu0 0
        %337 = vmatpush1.bf16.msra.mxu0 0
        %338 = vmatprep.subr.bf16.mxu0 0
        %339 = vmatpush1.bf16.msra.mxu0 0
        %340 = vmatprep.subr.bf16.mxu0 0
        %341 = vmatpush1.bf16.msra.mxu0 0
        %342 = vmatprep.subr.bf16.mxu0 0
        %343 = vmatpush1.bf16.msra.mxu0 0
        %344 = vmatprep.subr.bf16.mxu0 0
        %345 = vmatpush1.bf16.msra.mxu0 0
        %346 = vmatprep.mubr.bf16.mxu0 0
        %347 = vmatmul.mubr.bf16.gmra.mrb[0].mxu0 %v247
        %v348 = vpop.f32.mrb[0].mxu0
        %v349 = vadd.f32 %v185, %v348
        %v350 = vpop.f32.mrb[0].mxu0
        %v351 = vadd.f32 %v185, %v350
        %v352 = vpop.f32.mrb[0].mxu0
        %v353 = vadd.f32 %v185, %v352
        %v354 = vpop.f32.mrb[0].mxu0
        %v355 = vadd.f32 %v185, %v354
        %356 = vdwg.mxu0
        %357 = vmatprep.subr.bf16.mxu0 %v229
        %358 = vmatpush1.bf16.msra.mxu0 %v228
        %359 = vmatprep.subr.bf16.mxu0 %v266
        %360 = vmatpush1.bf16.msra.mxu0 %v263
        %361 = vmatprep.subr.bf16.mxu0 0
        %362 = vmatpush1.bf16.msra.mxu0 0
        %363 = vmatprep.subr.bf16.mxu0 0
        %364 = vmatpush1.bf16.msra.mxu0 0
        %365 = vmatprep.subr.bf16.mxu0 0
        %366 = vmatpush1.bf16.msra.mxu0 0
        %367 = vmatprep.subr.bf16.mxu0 0
        %368 = vmatpush1.bf16.msra.mxu0 0
        %369 = vmatprep.subr.bf16.mxu0 0
        %370 = vmatpush1.bf16.msra.mxu0 0
        %371 = vmatprep.subr.bf16.mxu0 0
        %372 = vmatpush1.bf16.msra.mxu0 0
        %373 = vmatprep.subr.bf16.mxu0 0
        %374 = vmatpush1.bf16.msra.mxu0 0
        %375 = vmatprep.subr.bf16.mxu0 0
        %376 = vmatpush1.bf16.msra.mxu0 0
        %377 = vmatprep.subr.bf16.mxu0 0
        %378 = vmatpush1.bf16.msra.mxu0 0
        %379 = vmatprep.subr.bf16.mxu0 0
        %380 = vmatpush1.bf16.msra.mxu0 0
        %381 = vmatprep.subr.bf16.mxu0 0
        %382 = vmatpush1.bf16.msra.mxu0 0
        %383 = vmatprep.subr.bf16.mxu0 0
        %384 = vmatpush1.bf16.msra.mxu0 0
        %385 = vmatprep.subr.bf16.mxu0 0
        %386 = vmatpush1.bf16.msra.mxu0 0
        %387 = vmatprep.subr.bf16.mxu0 0
        %388 = vmatpush1.bf16.msra.mxu0 0
        %389 = vmatprep.mubr.bf16.mxu0 0
        %390 = vmatmul.mubr.bf16.gmra.mrb[0].mxu0 %v247
        %v391 = vpop.f32.mrb[0].mxu0
        %v392 = vadd.f32 %v185, %v391
        %v393 = vpop.f32.mrb[0].mxu0
        %v394 = vadd.f32 %v185, %v393
        %v395 = vpop.f32.mrb[0].mxu0
        %v396 = vadd.f32 %v185, %v395
        %v397 = vpop.f32.mrb[0].mxu0
        %v398 = vadd.f32 %v185, %v397
        %399 = vdwg.mxu0
        %400 = vmatprep.subr.bf16.mxu0 0
        %401 = vmatpush1.bf16.msra.mxu0 %v230
        %402 = vmatprep.subr.bf16.mxu0 0
        %403 = vmatpush1.bf16.msra.mxu0 %v269
        %404 = vmatprep.subr.bf16.mxu0 0
        %405 = vmatpush1.bf16.msra.mxu0 0
        %406 = vmatprep.subr.bf16.mxu0 0
        %407 = vmatpush1.bf16.msra.mxu0 0
        %408 = vmatprep.subr.bf16.mxu0 0
        %409 = vmatpush1.bf16.msra.mxu0 0
        %410 = vmatprep.subr.bf16.mxu0 0
        %411 = vmatpush1.bf16.msra.mxu0 0
        %412 = vmatprep.subr.bf16.mxu0 0
        %413 = vmatpush1.bf16.msra.mxu0 0
        %414 = vmatprep.subr.bf16.mxu0 0
        %415 = vmatpush1.bf16.msra.mxu0 0
        %416 = vmatprep.subr.bf16.mxu0 0
        %417 = vmatpush1.bf16.msra.mxu0 0
        %418 = vmatprep.subr.bf16.mxu0 0
        %419 = vmatpush1.bf16.msra.mxu0 0
        %420 = vmatprep.subr.bf16.mxu0 0
        %421 = vmatpush1.bf16.msra.mxu0 0
        %422 = vmatprep.subr.bf16.mxu0 0
        %423 = vmatpush1.bf16.msra.mxu0 0
        %424 = vmatprep.subr.bf16.mxu0 0
        %425 = vmatpush1.bf16.msra.mxu0 0
        %426 = vmatprep.subr.bf16.mxu0 0
        %427 = vmatpush1.bf16.msra.mxu0 0
        %428 = vmatprep.subr.bf16.mxu0 0
        %429 = vmatpush1.bf16.msra.mxu0 0
        %430 = vmatprep.subr.bf16.mxu0 0
        %431 = vmatpush1.bf16.msra.mxu0 0
        %432 = vmatprep.mubr.bf16.mxu0 0
        %433 = vmatmul.mubr.bf16.gmra.mrb[0].mxu0 %v247
        %v434 = vpop.f32.mrb[0].mxu0
        %v435 = vadd.f32 %v185, %v434
        %v436 = vpop.f32.mrb[0].mxu0
        %v437 = vpop.f32.mrb[0].mxu0
        %v438 = vadd.f32 %v185, %v437
        %v439 = vpop.f32.mrb[0].mxu0
        %440 = vdwg.mxu0
        %v441 = vxor.u32 %v306, 2147483648
        %v442 = vxor.u32 %v308, 2147483648
        %v443 = vxor.u32 %v349, 2147483648
        %v444 = vxor.u32 %v351, 2147483648
        %v445 = vxor.u32 %v392, 2147483648
        %v446 = vxor.u32 %v394, 2147483648
        %v447 = vxor.u32 %v435, 2147483648
        %v448 = vxor.u32 %v310, 2147483648
        %v449 = vxor.u32 %v312, 2147483648
        %v450 = vxor.u32 %v353, 2147483648
        %v451 = vxor.u32 %v355, 2147483648
        %v452 = vxor.u32 %v396, 2147483648
        %v453 = vxor.u32 %v398, 2147483648
        %v454 = vxor.u32 %v438, 2147483648
        %v455 = vmul.f32 %v441, 1.442695
        %v456 = vpow.pop %v455
        %v457 = vmul.f32 %v442, 1.442695
        %v458 = vpow.pop %v457
        %v459 = vmul.f32 %v443, 1.442695
        %v460 = vpow.pop %v459
        %v461 = vmul.f32 %v444, 1.442695
        %v462 = vpow.pop %v461
        %v463 = vmul.f32 %v445, 1.442695
        %v464 = vpow.pop %v463
        %v465 = vmul.f32 %v446, 1.442695
        %v466 = vpow.pop %v465
        %v467 = vmul.f32 %v447, 1.442695
        %v468 = vpow.pop %v467
        %v469 = vmul.f32 %v448, 1.442695
        %v470 = vpow.pop %v469
        %v471 = vmul.f32 %v449, 1.442695
        %v472 = vpow.pop %v471
        %v473 = vmul.f32 %v450, 1.442695
        %v474 = vpow.pop %v473
        %v475 = vmul.f32 %v451, 1.442695
        %v476 = vpow.pop %v475
        %v477 = vmul.f32 %v452, 1.442695
        %v478 = vpow.pop %v477
        %v479 = vmul.f32 %v453, 1.442695
        %v480 = vpow.pop %v479
        %v481 = vmul.f32 %v454, 1.442695
        %v482 = vpow.pop %v481
        %v483 = vadd.f32 %v456, 1.0
        %v484 = vadd.f32 %v458, 1.0
        %v485 = vadd.f32 %v460, 1.0
        %v486 = vadd.f32 %v462, 1.0
        %v487 = vadd.f32 %v464, 1.0
        %v488 = vadd.f32 %v466, 1.0
        %v489 = vadd.f32 %v468, 1.0
        %v490 = vadd.f32 %v470, 1.0
        %v491 = vadd.f32 %v472, 1.0
        %v492 = vadd.f32 %v474, 1.0
        %v493 = vadd.f32 %v476, 1.0
        %v494 = vadd.f32 %v478, 1.0
        %v495 = vadd.f32 %v480, 1.0
        %v496 = vadd.f32 %v482, 1.0
        %v497 = vrcp.pop %v483
        %v498 = vmul.f32 1.0, %v497
        %v499 = vrcp.pop %v484
        %v500 = vmul.f32 1.0, %v499
        %v501 = vrcp.pop %v485
        %v502 = vmul.f32 1.0, %v501
        %v503 = vrcp.pop %v486
        %v504 = vmul.f32 1.0, %v503
        %v505 = vrcp.pop %v487
        %v506 = vmul.f32 1.0, %v505
        %v507 = vrcp.pop %v488
        %v508 = vmul.f32 1.0, %v507
        %v509 = vrcp.pop %v489
        %v510 = vmul.f32 1.0, %v509
        %v511 = vrcp.pop %v490
        %v512 = vmul.f32 1.0, %v511
        %v513 = vrcp.pop %v491
        %v514 = vmul.f32 1.0, %v513
        %v515 = vrcp.pop %v492
        %v516 = vmul.f32 1.0, %v515
        %v517 = vrcp.pop %v493
        %v518 = vmul.f32 1.0, %v517
        %v519 = vrcp.pop %v494
        %v520 = vmul.f32 1.0, %v519
        %v521 = vrcp.pop %v495
        %v522 = vmul.f32 1.0, %v521
        %v523 = vrcp.pop %v496
        %v524 = vmul.f32 1.0, %v523
        %525 = vst [vmem:[%s165] sm:$0xff] %v498
        %526 = vst [vmem:[%s165 + $0x8] sm:$0xff] %v500
        %527 = vst [vmem:[%s165 + $0x10] sm:$0xff] %v502
        %528 = vst [vmem:[%s165 + $0x18] sm:$0xff] %v504
        %529 = vst [vmem:[%s165 + $0x20] sm:$0xff] %v506
        %530 = vst [vmem:[%s165 + $0x28] sm:$0xff] %v508
        %531 = vst [vmem:[%s165 + $0x30] sm:$0xff] %v510
        %532 = vst [vmem:[%s165 + $0x188] sm:$0xff] %v512
        %533 = vst [vmem:[%s165 + $0x190] sm:$0xff] %v514
        %534 = vst [vmem:[%s165 + $0x198] sm:$0xff] %v516
        %535 = vst [vmem:[%s165 + $0x1a0] sm:$0xff] %v518
        %536 = vst [vmem:[%s165 + $0x1a8] sm:$0xff] %v520
        %537 = vst [vmem:[%s165 + $0x1b0] sm:$0xff] %v522
        %538 = vst [vmem:[%s165 + $0x1b8] sm:$0xff] %v524
        %s539 = scalar_lea.vmem %s146, 84 [#allocation4]
        %v540 = vld [vmem:[%s539] sm:$0xff]
        %v541 = vld [vmem:[%s539 + $0x8] sm:$0xff]
        %v542 = vld [vmem:[%s539 + $0x10] sm:$0xff]
        %v543 = vld [vmem:[%s539 + $0x18] sm:$0xf]
        %v544 = vld [vmem:[%s539 + $0x1c] sm:$0xff]
        %v545 = vld [vmem:[%s539 + $0x24] sm:$0xff]
        %v546 = vld [vmem:[%s539 + $0x2c] sm:$0xff]
        %v547 = vld [vmem:[%s539 + $0x34] sm:$0xf]
        %v548 = vld [vmem:[%s539 + $0x38] sm:$0xff]
        %v549 = vld [vmem:[%s539 + $0x40] sm:$0xff]
        %v550 = vld [vmem:[%s539 + $0x48] sm:$0xff]
        %v551 = vld [vmem:[%s539 + $0x50] sm:$0xf]
        %s552 = sadd.s32 %s183, 1
        %s553 = sld [smem:[#allocation3 + %s552]]
        %v554 = vstv %s553
        %v567 = vunpack.c.l.b16 %v540
        %v568 = vunpack.c.h.b16 %v540
        %v569 = vunpack.c.l.b16 %v541
        %v570 = vunpack.c.h.b16 %v541
        %v571 = vunpack.c.l.b16 %v542
        %v572 = vunpack.c.h.b16 %v542
        %v573 = vunpack.c.l.b16 %v543
        %v574 = vunpack.c.l.b16 %v544
        %v575 = vunpack.c.h.b16 %v544
        %v576 = vunpack.c.l.b16 %v545
        %v577 = vunpack.c.h.b16 %v545
        %v578 = vunpack.c.l.b16 %v546
        %v579 = vunpack.c.h.b16 %v546
        %v580 = vunpack.c.l.b16 %v547
        %v581 = vunpack.c.l.b16 %v548
        %v582 = vunpack.c.h.b16 %v548
        %v583 = vunpack.c.l.b16 %v549
        %v584 = vunpack.c.h.b16 %v549
        %v585 = vunpack.c.l.b16 %v550
        %v586 = vunpack.c.h.b16 %v550
        %v587 = vunpack.c.l.b16 %v551
        %v588 = vpack.c.b16 %v574, %v567
        %v589 = vpack.c.b16 %v575, %v568
        %v590 = vpack.c.b16 %v576, %v569
        %v591 = vpack.c.b16 %v577, %v570
        %v592 = vpack.c.b16 %v578, %v571
        %v593 = vpack.c.b16 %v579, %v572
        %v594 = vpack.c.b16 %v580, %v573
        %v595 = vpack.c.b16 %v581, %v581
        %v596 = vpack.c.b16 %v582, %v582
        %v597 = vpack.c.b16 %v583, %v583
        %v598 = vpack.c.b16 %v584, %v584
        %v599 = vpack.c.b16 %v585, %v585
        %v600 = vpack.c.b16 %v586, %v586
        %v601 = vpack.c.b16 %v587, %v587
        %v610 = vsel %vm249, %v595, 0
        %v613 = vsel %vm249, %v596, 0
        %v616 = vsel %vm249, %v597, 0
        %v619 = vsel %vm249, %v598, 0
        %v622 = vsel %vm249, %v599, 0
        %v625 = vsel %vm249, %v600, 0
        %v628 = vsel %vm249, %v601, 0
        %630 = vmatprep.subr.bf16.mxu0 %v589
        %631 = vmatpush1.bf16.msra.mxu0 %v588
        %632 = vmatprep.subr.bf16.mxu0 %v613
        %633 = vmatpush1.bf16.msra.mxu0 %v610
        %634 = vmatprep.subr.bf16.mxu0 0
        %635 = vmatpush1.bf16.msra.mxu0 0
        %636 = vmatprep.subr.bf16.mxu0 0
        %637 = vmatpush1.bf16.msra.mxu0 0
        %638 = vmatprep.subr.bf16.mxu0 0
        %639 = vmatpush1.bf16.msra.mxu0 0
        %640 = vmatprep.subr.bf16.mxu0 0
        %641 = vmatpush1.bf16.msra.mxu0 0
        %642 = vmatprep.subr.bf16.mxu0 0
        %643 = vmatpush1.bf16.msra.mxu0 0
        %644 = vmatprep.subr.bf16.mxu0 0
        %645 = vmatpush1.bf16.msra.mxu0 0
        %646 = vmatprep.subr.bf16.mxu0 0
        %647 = vmatpush1.bf16.msra.mxu0 0
        %648 = vmatprep.subr.bf16.mxu0 0
        %649 = vmatpush1.bf16.msra.mxu0 0
        %650 = vmatprep.subr.bf16.mxu0 0
        %651 = vmatpush1.bf16.msra.mxu0 0
        %652 = vmatprep.subr.bf16.mxu0 0
        %653 = vmatpush1.bf16.msra.mxu0 0
        %654 = vmatprep.subr.bf16.mxu0 0
        %655 = vmatpush1.bf16.msra.mxu0 0
        %656 = vmatprep.subr.bf16.mxu0 0
        %657 = vmatpush1.bf16.msra.mxu0 0
        %658 = vmatprep.subr.bf16.mxu0 0
        %659 = vmatpush1.bf16.msra.mxu0 0
        %660 = vmatprep.subr.bf16.mxu0 0
        %661 = vmatpush1.bf16.msra.mxu0 0
        %662 = vmatprep.mubr.bf16.mxu0 0
        %663 = vmatmul.mubr.bf16.gmra.mrb[0].mxu0 %v247
        %v664 = vpop.f32.mrb[0].mxu0
        %v665 = vadd.f32 %v554, %v664
        %v666 = vpop.f32.mrb[0].mxu0
        %v667 = vadd.f32 %v554, %v666
        %v668 = vpop.f32.mrb[0].mxu0
        %v669 = vadd.f32 %v554, %v668
        %v670 = vpop.f32.mrb[0].mxu0
        %v671 = vadd.f32 %v554, %v670
        %672 = vdwg.mxu0
        %673 = vmatprep.subr.bf16.mxu0 %v591
        %674 = vmatpush1.bf16.msra.mxu0 %v590
        %675 = vmatprep.subr.bf16.mxu0 %v619
        %676 = vmatpush1.bf16.msra.mxu0 %v616
        %677 = vmatprep.subr.bf16.mxu0 0
        %678 = vmatpush1.bf16.msra.mxu0 0
        %679 = vmatprep.subr.bf16.mxu0 0
        %680 = vmatpush1.bf16.msra.mxu0 0
        %681 = vmatprep.subr.bf16.mxu0 0
        %682 = vmatpush1.bf16.msra.mxu0 0
        %683 = vmatprep.subr.bf16.mxu0 0
        %684 = vmatpush1.bf16.msra.mxu0 0
        %685 = vmatprep.subr.bf16.mxu0 0
        %686 = vmatpush1.bf16.msra.mxu0 0
        %687 = vmatprep.subr.bf16.mxu0 0
        %688 = vmatpush1.bf16.msra.mxu0 0
        %689 = vmatprep.subr.bf16.mxu0 0
        %690 = vmatpush1.bf16.msra.mxu0 0
        %691 = vmatprep.subr.bf16.mxu0 0
        %692 = vmatpush1.bf16.msra.mxu0 0
        %693 = vmatprep.subr.bf16.mxu0 0
        %694 = vmatpush1.bf16.msra.mxu0 0
        %695 = vmatprep.subr.bf16.mxu0 0
        %696 = vmatpush1.bf16.msra.mxu0 0
        %697 = vmatprep.subr.bf16.mxu0 0
        %698 = vmatpush1.bf16.msra.mxu0 0
        %699 = vmatprep.subr.bf16.mxu0 0
        %700 = vmatpush1.bf16.msra.mxu0 0
        %701 = vmatprep.subr.bf16.mxu0 0
        %702 = vmatpush1.bf16.msra.mxu0 0
        %703 = vmatprep.subr.bf16.mxu0 0
        %704 = vmatpush1.bf16.msra.mxu0 0
        %705 = vmatprep.mubr.bf16.mxu0 0
        %706 = vmatmul.mubr.bf16.gmra.mrb[0].mxu0 %v247
        %v707 = vpop.f32.mrb[0].mxu0
        %v708 = vadd.f32 %v554, %v707
        %v709 = vpop.f32.mrb[0].mxu0
        %v710 = vadd.f32 %v554, %v709
        %v711 = vpop.f32.mrb[0].mxu0
        %v712 = vadd.f32 %v554, %v711
        %v713 = vpop.f32.mrb[0].mxu0
        %v714 = vadd.f32 %v554, %v713
        %715 = vdwg.mxu0
        %716 = vmatprep.subr.bf16.mxu0 %v593
        %717 = vmatpush1.bf16.msra.mxu0 %v592
        %718 = vmatprep.subr.bf16.mxu0 %v625
        %719 = vmatpush1.bf16.msra.mxu0 %v622
        %720 = vmatprep.subr.bf16.mxu0 0
        %721 = vmatpush1.bf16.msra.mxu0 0
        %722 = vmatprep.subr.bf16.mxu0 0
        %723 = vmatpush1.bf16.msra.mxu0 0
        %724 = vmatprep.subr.bf16.mxu0 0
        %725 = vmatpush1.bf16.msra.mxu0 0
        %726 = vmatprep.subr.bf16.mxu0 0
        %727 = vmatpush1.bf16.msra.mxu0 0
        %728 = vmatprep.subr.bf16.mxu0 0
        %729 = vmatpush1.bf16.msra.mxu0 0
        %730 = vmatprep.subr.bf16.mxu0 0
        %731 = vmatpush1.bf16.msra.mxu0 0
        %732 = vmatprep.subr.bf16.mxu0 0
        %733 = vmatpush1.bf16.msra.mxu0 0
        %734 = vmatprep.subr.bf16.mxu0 0
        %735 = vmatpush1.bf16.msra.mxu0 0
        %736 = vmatprep.subr.bf16.mxu0 0
        %737 = vmatpush1.bf16.msra.mxu0 0
        %738 = vmatprep.subr.bf16.mxu0 0
        %739 = vmatpush1.bf16.msra.mxu0 0
        %740 = vmatprep.subr.bf16.mxu0 0
        %741 = vmatpush1.bf16.msra.mxu0 0
        %742 = vmatprep.subr.bf16.mxu0 0
        %743 = vmatpush1.bf16.msra.mxu0 0
        %744 = vmatprep.subr.bf16.mxu0 0
        %745 = vmatpush1.bf16.msra.mxu0 0
        %746 = vmatprep.subr.bf16.mxu0 0
        %747 = vmatpush1.bf16.msra.mxu0 0
        %748 = vmatprep.mubr.bf16.mxu0 0
        %749 = vmatmul.mubr.bf16.gmra.mrb[0].mxu0 %v247
        %v750 = vpop.f32.mrb[0].mxu0
        %v751 = vadd.f32 %v554, %v750
        %v752 = vpop.f32.mrb[0].mxu0
        %v753 = vadd.f32 %v554, %v752
        %v754 = vpop.f32.mrb[0].mxu0
        %v755 = vadd.f32 %v554, %v754
        %v756 = vpop.f32.mrb[0].mxu0
        %v757 = vadd.f32 %v554, %v756
        %758 = vdwg.mxu0
        %759 = vmatprep.subr.bf16.mxu0 0
        %760 = vmatpush1.bf16.msra.mxu0 %v594
        %761 = vmatprep.subr.bf16.mxu0 0
        %762 = vmatpush1.bf16.msra.mxu0 %v628
        %763 = vmatprep.subr.bf16.mxu0 0
        %764 = vmatpush1.bf16.msra.mxu0 0
        %765 = vmatprep.subr.bf16.mxu0 0
        %766 = vmatpush1.bf16.msra.mxu0 0
        %767 = vmatprep.subr.bf16.mxu0 0
        %768 = vmatpush1.bf16.msra.mxu0 0
        %769 = vmatprep.subr.bf16.mxu0 0
        %770 = vmatpush1.bf16.msra.mxu0 0
        %771 = vmatprep.subr.bf16.mxu0 0
        %772 = vmatpush1.bf16.msra.mxu0 0
        %773 = vmatprep.subr.bf16.mxu0 0
        %774 = vmatpush1.bf16.msra.mxu0 0
        %775 = vmatprep.subr.bf16.mxu0 0
        %776 = vmatpush1.bf16.msra.mxu0 0
        %777 = vmatprep.subr.bf16.mxu0 0
        %778 = vmatpush1.bf16.msra.mxu0 0
        %779 = vmatprep.subr.bf16.mxu0 0
        %780 = vmatpush1.bf16.msra.mxu0 0
        %781 = vmatprep.subr.bf16.mxu0 0
        %782 = vmatpush1.bf16.msra.mxu0 0
        %783 = vmatprep.subr.bf16.mxu0 0
        %784 = vmatpush1.bf16.msra.mxu0 0
        %785 = vmatprep.subr.bf16.mxu0 0
        %786 = vmatpush1.bf16.msra.mxu0 0
        %787 = vmatprep.subr.bf16.mxu0 0
        %788 = vmatpush1.bf16.msra.mxu0 0
        %789 = vmatprep.subr.bf16.mxu0 0
        %790 = vmatpush1.bf16.msra.mxu0 0
        %791 = vmatprep.mubr.bf16.mxu0 0
        %792 = vmatmul.mubr.bf16.gmra.mrb[0].mxu0 %v247
        %v793 = vpop.f32.mrb[0].mxu0
        %v794 = vadd.f32 %v554, %v793
        %v795 = vpop.f32.mrb[0].mxu0
        %v796 = vpop.f32.mrb[0].mxu0
        %v797 = vadd.f32 %v554, %v796
        %v798 = vpop.f32.mrb[0].mxu0
        %799 = vdwg.mxu0
        %v800 = vxor.u32 %v665, 2147483648
        %v801 = vxor.u32 %v667, 2147483648
        %v802 = vxor.u32 %v708, 2147483648
        %v803 = vxor.u32 %v710, 2147483648
        %v804 = vxor.u32 %v751, 2147483648
        %v805 = vxor.u32 %v753, 2147483648
        %v806 = vxor.u32 %v794, 2147483648
        %v807 = vxor.u32 %v669, 2147483648
        %v808 = vxor.u32 %v671, 2147483648
        %v809 = vxor.u32 %v712, 2147483648
        %v810 = vxor.u32 %v714, 2147483648
        %v811 = vxor.u32 %v755, 2147483648
        %v812 = vxor.u32 %v757, 2147483648
        %v813 = vxor.u32 %v797, 2147483648
        %v814 = vmul.f32 %v800, 1.442695
        %v815 = vpow.pop %v814
        %v816 = vmul.f32 %v801, 1.442695
        %v817 = vpow.pop %v816
        %v818 = vmul.f32 %v802, 1.442695
        %v819 = vpow.pop %v818
        %v820 = vmul.f32 %v803, 1.442695
        %v821 = vpow.pop %v820
        %v822 = vmul.f32 %v804, 1.442695
        %v823 = vpow.pop %v822
        %v824 = vmul.f32 %v805, 1.442695
        %v825 = vpow.pop %v824
        %v826 = vmul.f32 %v806, 1.442695
        %v827 = vpow.pop %v826
        %v828 = vmul.f32 %v807, 1.442695
        %v829 = vpow.pop %v828
        %v830 = vmul.f32 %v808, 1.442695
        %v831 = vpow.pop %v830
        %v832 = vmul.f32 %v809, 1.442695
        %v833 = vpow.pop %v832
        %v834 = vmul.f32 %v810, 1.442695
        %v835 = vpow.pop %v834
        %v836 = vmul.f32 %v811, 1.442695
        %v837 = vpow.pop %v836
        %v838 = vmul.f32 %v812, 1.442695
        %v839 = vpow.pop %v838
        %v840 = vmul.f32 %v813, 1.442695
        %v841 = vpow.pop %v840
        %v842 = vadd.f32 %v815, 1.0
        %v843 = vadd.f32 %v817, 1.0
        %v844 = vadd.f32 %v819, 1.0
        %v845 = vadd.f32 %v821, 1.0
        %v846 = vadd.f32 %v823, 1.0
        %v847 = vadd.f32 %v825, 1.0
        %v848 = vadd.f32 %v827, 1.0
        %v849 = vadd.f32 %v829, 1.0
        %v850 = vadd.f32 %v831, 1.0
        %v851 = vadd.f32 %v833, 1.0
        %v852 = vadd.f32 %v835, 1.0
        %v853 = vadd.f32 %v837, 1.0
        %v854 = vadd.f32 %v839, 1.0
        %v855 = vadd.f32 %v841, 1.0
        %v856 = vrcp.pop %v842
        %v857 = vmul.f32 1.0, %v856
        %v858 = vrcp.pop %v843
        %v859 = vmul.f32 1.0, %v858
        %v860 = vrcp.pop %v844
        %v861 = vmul.f32 1.0, %v860
        %v862 = vrcp.pop %v845
        %v863 = vmul.f32 1.0, %v862
        %v864 = vrcp.pop %v846
        %v865 = vmul.f32 1.0, %v864
        %v866 = vrcp.pop %v847
        %v867 = vmul.f32 1.0, %v866
        %v868 = vrcp.pop %v848
        %v869 = vmul.f32 1.0, %v868
        %v870 = vrcp.pop %v849
        %v871 = vmul.f32 1.0, %v870
        %v872 = vrcp.pop %v850
        %v873 = vmul.f32 1.0, %v872
        %v874 = vrcp.pop %v851
        %v875 = vmul.f32 1.0, %v874
        %v876 = vrcp.pop %v852
        %v877 = vmul.f32 1.0, %v876
        %v878 = vrcp.pop %v853
        %v879 = vmul.f32 1.0, %v878
        %v880 = vrcp.pop %v854
        %v881 = vmul.f32 1.0, %v880
        %v882 = vrcp.pop %v855
        %v883 = vmul.f32 1.0, %v882
        %s884 = scalar_lea.vmem %s165, 56 [#allocation6]
        %885 = vst [vmem:[%s884] sm:$0xff] %v857
        %886 = vst [vmem:[%s884 + $0x8] sm:$0xff] %v859
        %887 = vst [vmem:[%s884 + $0x10] sm:$0xff] %v861
        %888 = vst [vmem:[%s884 + $0x18] sm:$0xff] %v863
        %889 = vst [vmem:[%s884 + $0x20] sm:$0xff] %v865
        %890 = vst [vmem:[%s884 + $0x28] sm:$0xff] %v867
        %891 = vst [vmem:[%s884 + $0x30] sm:$0xff] %v869
        %892 = vst [vmem:[%s884 + $0x188] sm:$0xff] %v871
        %893 = vst [vmem:[%s884 + $0x190] sm:$0xff] %v873
        %894 = vst [vmem:[%s884 + $0x198] sm:$0xff] %v875
        %895 = vst [vmem:[%s884 + $0x1a0] sm:$0xff] %v877
        %896 = vst [vmem:[%s884 + $0x1a8] sm:$0xff] %v879
        %897 = vst [vmem:[%s884 + $0x1b0] sm:$0xff] %v881
        %898 = vst [vmem:[%s884 + $0x1b8] sm:$0xff] %v883
        %s899 = scalar_lea.vmem %s146, 168 [#allocation4]
        %v900 = vld [vmem:[%s899] sm:$0xff]
        %v901 = vld [vmem:[%s899 + $0x8] sm:$0xff]
        %v902 = vld [vmem:[%s899 + $0x10] sm:$0xff]
        %v903 = vld [vmem:[%s899 + $0x18] sm:$0xf]
        %v904 = vld [vmem:[%s899 + $0x1c] sm:$0xff]
        %v905 = vld [vmem:[%s899 + $0x24] sm:$0xff]
        %v906 = vld [vmem:[%s899 + $0x2c] sm:$0xff]
        %v907 = vld [vmem:[%s899 + $0x34] sm:$0xf]
        %v908 = vld [vmem:[%s899 + $0x38] sm:$0xff]
        %v909 = vld [vmem:[%s899 + $0x40] sm:$0xff]
        %v910 = vld [vmem:[%s899 + $0x48] sm:$0xff]
        %v911 = vld [vmem:[%s899 + $0x50] sm:$0xf]
        %s912 = sadd.s32 %s183, 2
        %s913 = sld [smem:[#allocation3 + %s912]]
        %v914 = vstv %s913
        %v927 = vunpack.c.l.b16 %v900
        %v928 = vunpack.c.h.b16 %v900
        %v929 = vunpack.c.l.b16 %v901
        %v930 = vunpack.c.h.b16 %v901
        %v931 = vunpack.c.l.b16 %v902
        %v932 = vunpack.c.h.b16 %v902
        %v933 = vunpack.c.l.b16 %v903
        %v934 = vunpack.c.l.b16 %v904
        %v935 = vunpack.c.h.b16 %v904
        %v936 = vunpack.c.l.b16 %v905
        %v937 = vunpack.c.h.b16 %v905
        %v938 = vunpack.c.l.b16 %v906
        %v939 = vunpack.c.h.b16 %v906
        %v940 = vunpack.c.l.b16 %v907
        %v941 = vunpack.c.l.b16 %v908
        %v942 = vunpack.c.h.b16 %v908
        %v943 = vunpack.c.l.b16 %v909
        %v944 = vunpack.c.h.b16 %v909
        %v945 = vunpack.c.l.b16 %v910
        %v946 = vunpack.c.h.b16 %v910
        %v947 = vunpack.c.l.b16 %v911
        %v948 = vpack.c.b16 %v934, %v927
        %v949 = vpack.c.b16 %v935, %v928
        %v950 = vpack.c.b16 %v936, %v929
        %v951 = vpack.c.b16 %v937, %v930
        %v952 = vpack.c.b16 %v938, %v931
        %v953 = vpack.c.b16 %v939, %v932
        %v954 = vpack.c.b16 %v940, %v933
        %v955 = vpack.c.b16 %v941, %v941
        %v956 = vpack.c.b16 %v942, %v942
        %v957 = vpack.c.b16 %v943, %v943
        %v958 = vpack.c.b16 %v944, %v944
        %v959 = vpack.c.b16 %v945, %v945
        %v960 = vpack.c.b16 %v946, %v946
        %v961 = vpack.c.b16 %v947, %v947
        %v970 = vsel %vm249, %v955, 0
        %v973 = vsel %vm249, %v956, 0
        %v976 = vsel %vm249, %v957, 0
        %v979 = vsel %vm249, %v958, 0
        %v982 = vsel %vm249, %v959, 0
        %v985 = vsel %vm249, %v960, 0
        %v988 = vsel %vm249, %v961, 0
        %990 = vmatprep.subr.bf16.mxu0 %v949
        %991 = vmatpush1.bf16.msra.mxu0 %v948
        %992 = vmatprep.subr.bf16.mxu0 %v973
        %993 = vmatpush1.bf16.msra.mxu0 %v970
        %994 = vmatprep.subr.bf16.mxu0 0
        %995 = vmatpush1.bf16.msra.mxu0 0
        %996 = vmatprep.subr.bf16.mxu0 0
        %997 = vmatpush1.bf16.msra.mxu0 0
        %998 = vmatprep.subr.bf16.mxu0 0
        %999 = vmatpush1.bf16.msra.mxu0 0
        %1000 = vmatprep.subr.bf16.mxu0 0
        %1001 = vmatpush1.bf16.msra.mxu0 0
        %1002 = vmatprep.subr.bf16.mxu0 0
        %1003 = vmatpush1.bf16.msra.mxu0 0
        %1004 = vmatprep.subr.bf16.mxu0 0
        %1005 = vmatpush1.bf16.msra.mxu0 0
        %1006 = vmatprep.subr.bf16.mxu0 0
        %1007 = vmatpush1.bf16.msra.mxu0 0
        %1008 = vmatprep.subr.bf16.mxu0 0
        %1009 = vmatpush1.bf16.msra.mxu0 0
        %1010 = vmatprep.subr.bf16.mxu0 0
        %1011 = vmatpush1.bf16.msra.mxu0 0
        %1012 = vmatprep.subr.bf16.mxu0 0
        %1013 = vmatpush1.bf16.msra.mxu0 0
        %1014 = vmatprep.subr.bf16.mxu0 0
        %1015 = vmatpush1.bf16.msra.mxu0 0
        %1016 = vmatprep.subr.bf16.mxu0 0
        %1017 = vmatpush1.bf16.msra.mxu0 0
        %1018 = vmatprep.subr.bf16.mxu0 0
        %1019 = vmatpush1.bf16.msra.mxu0 0
        %1020 = vmatprep.subr.bf16.mxu0 0
        %1021 = vmatpush1.bf16.msra.mxu0 0
        %1022 = vmatprep.mubr.bf16.mxu0 0
        %1023 = vmatmul.mubr.bf16.gmra.mrb[0].mxu0 %v247
        %v1024 = vpop.f32.mrb[0].mxu0
        %v1025 = vadd.f32 %v914, %v1024
        %v1026 = vpop.f32.mrb[0].mxu0
        %v1027 = vadd.f32 %v914, %v1026
        %v1028 = vpop.f32.mrb[0].mxu0
        %v1029 = vadd.f32 %v914, %v1028
        %v1030 = vpop.f32.mrb[0].mxu0
        %v1031 = vadd.f32 %v914, %v1030
        %1032 = vdwg.mxu0
        %1033 = vmatprep.subr.bf16.mxu0 %v951
        %1034 = vmatpush1.bf16.msra.mxu0 %v950
        %1035 = vmatprep.subr.bf16.mxu0 %v979
        %1036 = vmatpush1.bf16.msra.mxu0 %v976
        %1037 = vmatprep.subr.bf16.mxu0 0
        %1038 = vmatpush1.bf16.msra.mxu0 0
        %1039 = vmatprep.subr.bf16.mxu0 0
        %1040 = vmatpush1.bf16.msra.mxu0 0
        %1041 = vmatprep.subr.bf16.mxu0 0
        %1042 = vmatpush1.bf16.msra.mxu0 0
        %1043 = vmatprep.subr.bf16.mxu0 0
        %1044 = vmatpush1.bf16.msra.mxu0 0
        %1045 = vmatprep.subr.bf16.mxu0 0
        %1046 = vmatpush1.bf16.msra.mxu0 0
        %1047 = vmatprep.subr.bf16.mxu0 0
        %1048 = vmatpush1.bf16.msra.mxu0 0
        %1049 = vmatprep.subr.bf16.mxu0 0
        %1050 = vmatpush1.bf16.msra.mxu0 0
        %1051 = vmatprep.subr.bf16.mxu0 0
        %1052 = vmatpush1.bf16.msra.mxu0 0
        %1053 = vmatprep.subr.bf16.mxu0 0
        %1054 = vmatpush1.bf16.msra.mxu0 0
        %1055 = vmatprep.subr.bf16.mxu0 0
        %1056 = vmatpush1.bf16.msra.mxu0 0
        %1057 = vmatprep.subr.bf16.mxu0 0
        %1058 = vmatpush1.bf16.msra.mxu0 0
        %1059 = vmatprep.subr.bf16.mxu0 0
        %1060 = vmatpush1.bf16.msra.mxu0 0
        %1061 = vmatprep.subr.bf16.mxu0 0
        %1062 = vmatpush1.bf16.msra.mxu0 0
        %1063 = vmatprep.subr.bf16.mxu0 0
        %1064 = vmatpush1.bf16.msra.mxu0 0
        %1065 = vmatprep.mubr.bf16.mxu0 0
        %1066 = vmatmul.mubr.bf16.gmra.mrb[0].mxu0 %v247
        %v1067 = vpop.f32.mrb[0].mxu0
        %v1068 = vadd.f32 %v914, %v1067
        %v1069 = vpop.f32.mrb[0].mxu0
        %v1070 = vadd.f32 %v914, %v1069
        %v1071 = vpop.f32.mrb[0].mxu0
        %v1072 = vadd.f32 %v914, %v1071
        %v1073 = vpop.f32.mrb[0].mxu0
        %v1074 = vadd.f32 %v914, %v1073
        %1075 = vdwg.mxu0
        %1076 = vmatprep.subr.bf16.mxu0 %v953
        %1077 = vmatpush1.bf16.msra.mxu0 %v952
        %1078 = vmatprep.subr.bf16.mxu0 %v985
        %1079 = vmatpush1.bf16.msra.mxu0 %v982
        %1080 = vmatprep.subr.bf16.mxu0 0
        %1081 = vmatpush1.bf16.msra.mxu0 0
        %1082 = vmatprep.subr.bf16.mxu0 0
        %1083 = vmatpush1.bf16.msra.mxu0 0
        %1084 = vmatprep.subr.bf16.mxu0 0
        %1085 = vmatpush1.bf16.msra.mxu0 0
        %1086 = vmatprep.subr.bf16.mxu0 0
        %1087 = vmatpush1.bf16.msra.mxu0 0
        %1088 = vmatprep.subr.bf16.mxu0 0
        %1089 = vmatpush1.bf16.msra.mxu0 0
        %1090 = vmatprep.subr.bf16.mxu0 0
        %1091 = vmatpush1.bf16.msra.mxu0 0
        %1092 = vmatprep.subr.bf16.mxu0 0
        %1093 = vmatpush1.bf16.msra.mxu0 0
        %1094 = vmatprep.subr.bf16.mxu0 0
        %1095 = vmatpush1.bf16.msra.mxu0 0
        %1096 = vmatprep.subr.bf16.mxu0 0
        %1097 = vmatpush1.bf16.msra.mxu0 0
        %1098 = vmatprep.subr.bf16.mxu0 0
        %1099 = vmatpush1.bf16.msra.mxu0 0
        %1100 = vmatprep.subr.bf16.mxu0 0
        %1101 = vmatpush1.bf16.msra.mxu0 0
        %1102 = vmatprep.subr.bf16.mxu0 0
        %1103 = vmatpush1.bf16.msra.mxu0 0
        %1104 = vmatprep.subr.bf16.mxu0 0
        %1105 = vmatpush1.bf16.msra.mxu0 0
        %1106 = vmatprep.subr.bf16.mxu0 0
        %1107 = vmatpush1.bf16.msra.mxu0 0
        %1108 = vmatprep.mubr.bf16.mxu0 0
        %1109 = vmatmul.mubr.bf16.gmra.mrb[0].mxu0 %v247
        %v1110 = vpop.f32.mrb[0].mxu0
        %v1111 = vadd.f32 %v914, %v1110
        %v1112 = vpop.f32.mrb[0].mxu0
        %v1113 = vadd.f32 %v914, %v1112
        %v1114 = vpop.f32.mrb[0].mxu0
        %v1115 = vadd.f32 %v914, %v1114
        %v1116 = vpop.f32.mrb[0].mxu0
        %v1117 = vadd.f32 %v914, %v1116
        %1118 = vdwg.mxu0
        %1119 = vmatprep.subr.bf16.mxu0 0
        %1120 = vmatpush1.bf16.msra.mxu0 %v954
        %1121 = vmatprep.subr.bf16.mxu0 0
        %1122 = vmatpush1.bf16.msra.mxu0 %v988
        %1123 = vmatprep.subr.bf16.mxu0 0
        %1124 = vmatpush1.bf16.msra.mxu0 0
        %1125 = vmatprep.subr.bf16.mxu0 0
        %1126 = vmatpush1.bf16.msra.mxu0 0
        %1127 = vmatprep.subr.bf16.mxu0 0
        %1128 = vmatpush1.bf16.msra.mxu0 0
        %1129 = vmatprep.subr.bf16.mxu0 0
        %1130 = vmatpush1.bf16.msra.mxu0 0
        %1131 = vmatprep.subr.bf16.mxu0 0
        %1132 = vmatpush1.bf16.msra.mxu0 0
        %1133 = vmatprep.subr.bf16.mxu0 0
        %1134 = vmatpush1.bf16.msra.mxu0 0
        %1135 = vmatprep.subr.bf16.mxu0 0
        %1136 = vmatpush1.bf16.msra.mxu0 0
        %1137 = vmatprep.subr.bf16.mxu0 0
        %1138 = vmatpush1.bf16.msra.mxu0 0
        %1139 = vmatprep.subr.bf16.mxu0 0
        %1140 = vmatpush1.bf16.msra.mxu0 0
        %1141 = vmatprep.subr.bf16.mxu0 0
        %1142 = vmatpush1.bf16.msra.mxu0 0
        %1143 = vmatprep.subr.bf16.mxu0 0
        %1144 = vmatpush1.bf16.msra.mxu0 0
        %1145 = vmatprep.subr.bf16.mxu0 0
        %1146 = vmatpush1.bf16.msra.mxu0 0
        %1147 = vmatprep.subr.bf16.mxu0 0
        %1148 = vmatpush1.bf16.msra.mxu0 0
        %1149 = vmatprep.subr.bf16.mxu0 0
        %1150 = vmatpush1.bf16.msra.mxu0 0
        %1151 = vmatprep.mubr.bf16.mxu0 0
        %1152 = vmatmul.mubr.bf16.gmra.mrb[0].mxu0 %v247
        %v1153 = vpop.f32.mrb[0].mxu0
        %v1154 = vadd.f32 %v914, %v1153
        %v1155 = vpop.f32.mrb[0].mxu0
        %v1156 = vpop.f32.mrb[0].mxu0
        %v1157 = vadd.f32 %v914, %v1156
        %v1158 = vpop.f32.mrb[0].mxu0
        %1159 = vdwg.mxu0
        %v1160 = vxor.u32 %v1025, 2147483648
        %v1161 = vxor.u32 %v1027, 2147483648
        %v1162 = vxor.u32 %v1068, 2147483648
        %v1163 = vxor.u32 %v1070, 2147483648
        %v1164 = vxor.u32 %v1111, 2147483648
        %v1165 = vxor.u32 %v1113, 2147483648
        %v1166 = vxor.u32 %v1154, 2147483648
        %v1167 = vxor.u32 %v1029, 2147483648
        %v1168 = vxor.u32 %v1031, 2147483648
        %v1169 = vxor.u32 %v1072, 2147483648
        %v1170 = vxor.u32 %v1074, 2147483648
        %v1171 = vxor.u32 %v1115, 2147483648
        %v1172 = vxor.u32 %v1117, 2147483648
        %v1173 = vxor.u32 %v1157, 2147483648
        %v1174 = vmul.f32 %v1160, 1.442695
        %v1175 = vpow.pop %v1174
        %v1176 = vmul.f32 %v1161, 1.442695
        %v1177 = vpow.pop %v1176
        %v1178 = vmul.f32 %v1162, 1.442695
        %v1179 = vpow.pop %v1178
        %v1180 = vmul.f32 %v1163, 1.442695
        %v1181 = vpow.pop %v1180
        %v1182 = vmul.f32 %v1164, 1.442695
        %v1183 = vpow.pop %v1182
        %v1184 = vmul.f32 %v1165, 1.442695
        %v1185 = vpow.pop %v1184
        %v1186 = vmul.f32 %v1166, 1.442695
        %v1187 = vpow.pop %v1186
        %v1188 = vmul.f32 %v1167, 1.442695
        %v1189 = vpow.pop %v1188
        %v1190 = vmul.f32 %v1168, 1.442695
        %v1191 = vpow.pop %v1190
        %v1192 = vmul.f32 %v1169, 1.442695
        %v1193 = vpow.pop %v1192
        %v1194 = vmul.f32 %v1170, 1.442695
        %v1195 = vpow.pop %v1194
        %v1196 = vmul.f32 %v1171, 1.442695
        %v1197 = vpow.pop %v1196
        %v1198 = vmul.f32 %v1172, 1.442695
        %v1199 = vpow.pop %v1198
        %v1200 = vmul.f32 %v1173, 1.442695
        %v1201 = vpow.pop %v1200
        %v1202 = vadd.f32 %v1175, 1.0
        %v1203 = vadd.f32 %v1177, 1.0
        %v1204 = vadd.f32 %v1179, 1.0
        %v1205 = vadd.f32 %v1181, 1.0
        %v1206 = vadd.f32 %v1183, 1.0
        %v1207 = vadd.f32 %v1185, 1.0
        %v1208 = vadd.f32 %v1187, 1.0
        %v1209 = vadd.f32 %v1189, 1.0
        %v1210 = vadd.f32 %v1191, 1.0
        %v1211 = vadd.f32 %v1193, 1.0
        %v1212 = vadd.f32 %v1195, 1.0
        %v1213 = vadd.f32 %v1197, 1.0
        %v1214 = vadd.f32 %v1199, 1.0
        %v1215 = vadd.f32 %v1201, 1.0
        %v1216 = vrcp.pop %v1202
        %v1217 = vmul.f32 1.0, %v1216
        %v1218 = vrcp.pop %v1203
        %v1219 = vmul.f32 1.0, %v1218
        %v1220 = vrcp.pop %v1204
        %v1221 = vmul.f32 1.0, %v1220
        %v1222 = vrcp.pop %v1205
        %v1223 = vmul.f32 1.0, %v1222
        %v1224 = vrcp.pop %v1206
        %v1225 = vmul.f32 1.0, %v1224
        %v1226 = vrcp.pop %v1207
        %v1227 = vmul.f32 1.0, %v1226
        %v1228 = vrcp.pop %v1208
        %v1229 = vmul.f32 1.0, %v1228
        %v1230 = vrcp.pop %v1209
        %v1231 = vmul.f32 1.0, %v1230
        %v1232 = vrcp.pop %v1210
        %v1233 = vmul.f32 1.0, %v1232
        %v1234 = vrcp.pop %v1211
        %v1235 = vmul.f32 1.0, %v1234
        %v1236 = vrcp.pop %v1212
        %v1237 = vmul.f32 1.0, %v1236
        %v1238 = vrcp.pop %v1213
        %v1239 = vmul.f32 1.0, %v1238
        %v1240 = vrcp.pop %v1214
        %v1241 = vmul.f32 1.0, %v1240
        %v1242 = vrcp.pop %v1215
        %v1243 = vmul.f32 1.0, %v1242
        %s1244 = scalar_lea.vmem %s165, 112 [#allocation6]
        %1245 = vst [vmem:[%s1244] sm:$0xff] %v1217
        %1246 = vst [vmem:[%s1244 + $0x8] sm:$0xff] %v1219
        %1247 = vst [vmem:[%s1244 + $0x10] sm:$0xff] %v1221
        %1248 = vst [vmem:[%s1244 + $0x18] sm:$0xff] %v1223
        %1249 = vst [vmem:[%s1244 + $0x20] sm:$0xff] %v1225
        %1250 = vst [vmem:[%s1244 + $0x28] sm:$0xff] %v1227
        %1251 = vst [vmem:[%s1244 + $0x30] sm:$0xff] %v1229
        %1252 = vst [vmem:[%s1244 + $0x188] sm:$0xff] %v1231
        %1253 = vst [vmem:[%s1244 + $0x190] sm:$0xff] %v1233
        %1254 = vst [vmem:[%s1244 + $0x198] sm:$0xff] %v1235
        %1255 = vst [vmem:[%s1244 + $0x1a0] sm:$0xff] %v1237
        %1256 = vst [vmem:[%s1244 + $0x1a8] sm:$0xff] %v1239
        %1257 = vst [vmem:[%s1244 + $0x1b0] sm:$0xff] %v1241
        %1258 = vst [vmem:[%s1244 + $0x1b8] sm:$0xff] %v1243
        %s1259 = scalar_lea.vmem %s146, 252 [#allocation4]
        %v1260 = vld [vmem:[%s1259] sm:$0xff]
        %v1261 = vld [vmem:[%s1259 + $0x8] sm:$0xff]
        %v1262 = vld [vmem:[%s1259 + $0x10] sm:$0xff]
        %v1263 = vld [vmem:[%s1259 + $0x18] sm:$0xf]
        %v1264 = vld [vmem:[%s1259 + $0x1c] sm:$0xff]
        %v1265 = vld [vmem:[%s1259 + $0x24] sm:$0xff]
        %v1266 = vld [vmem:[%s1259 + $0x2c] sm:$0xff]
        %v1267 = vld [vmem:[%s1259 + $0x34] sm:$0xf]
        %v1268 = vld [vmem:[%s1259 + $0x38] sm:$0xff]
        %v1269 = vld [vmem:[%s1259 + $0x40] sm:$0xff]
        %v1270 = vld [vmem:[%s1259 + $0x48] sm:$0xff]
        %v1271 = vld [vmem:[%s1259 + $0x50] sm:$0xf]
        %s1272 = sadd.s32 %s183, 3
        %s1273 = sld [smem:[#allocation3 + %s1272]]
        %v1274 = vstv %s1273
        %v1287 = vunpack.c.l.b16 %v1260
        %v1288 = vunpack.c.h.b16 %v1260
        %v1289 = vunpack.c.l.b16 %v1261
        %v1290 = vunpack.c.h.b16 %v1261
        %v1291 = vunpack.c.l.b16 %v1262
        %v1292 = vunpack.c.h.b16 %v1262
        %v1293 = vunpack.c.l.b16 %v1263
        %v1294 = vunpack.c.l.b16 %v1264
        %v1295 = vunpack.c.h.b16 %v1264
        %v1296 = vunpack.c.l.b16 %v1265
        %v1297 = vunpack.c.h.b16 %v1265
        %v1298 = vunpack.c.l.b16 %v1266
        %v1299 = vunpack.c.h.b16 %v1266
        %v1300 = vunpack.c.l.b16 %v1267
        %v1301 = vunpack.c.l.b16 %v1268
        %v1302 = vunpack.c.h.b16 %v1268
        %v1303 = vunpack.c.l.b16 %v1269
        %v1304 = vunpack.c.h.b16 %v1269
        %v1305 = vunpack.c.l.b16 %v1270
        %v1306 = vunpack.c.h.b16 %v1270
        %v1307 = vunpack.c.l.b16 %v1271
        %v1308 = vpack.c.b16 %v1294, %v1287
        %v1309 = vpack.c.b16 %v1295, %v1288
        %v1310 = vpack.c.b16 %v1296, %v1289
        %v1311 = vpack.c.b16 %v1297, %v1290
        %v1312 = vpack.c.b16 %v1298, %v1291
        %v1313 = vpack.c.b16 %v1299, %v1292
        %v1314 = vpack.c.b16 %v1300, %v1293
        %v1315 = vpack.c.b16 %v1301, %v1301
        %v1316 = vpack.c.b16 %v1302, %v1302
        %v1317 = vpack.c.b16 %v1303, %v1303
        %v1318 = vpack.c.b16 %v1304, %v1304
        %v1319 = vpack.c.b16 %v1305, %v1305
        %v1320 = vpack.c.b16 %v1306, %v1306
        %v1321 = vpack.c.b16 %v1307, %v1307
        %v1330 = vsel %vm249, %v1315, 0
        %v1333 = vsel %vm249, %v1316, 0
        %v1336 = vsel %vm249, %v1317, 0
        %v1339 = vsel %vm249, %v1318, 0
        %v1342 = vsel %vm249, %v1319, 0
        %v1345 = vsel %vm249, %v1320, 0
        %v1348 = vsel %vm249, %v1321, 0
        %1350 = vmatprep.subr.bf16.mxu0 %v1309
        %1351 = vmatpush1.bf16.msra.mxu0 %v1308
        %1352 = vmatprep.subr.bf16.mxu0 %v1333
        %1353 = vmatpush1.bf16.msra.mxu0 %v1330
        %1354 = vmatprep.subr.bf16.mxu0 0
        %1355 = vmatpush1.bf16.msra.mxu0 0
        %1356 = vmatprep.subr.bf16.mxu0 0
        %1357 = vmatpush1.bf16.msra.mxu0 0
        %1358 = vmatprep.subr.bf16.mxu0 0
        %1359 = vmatpush1.bf16.msra.mxu0 0
        %1360 = vmatprep.subr.bf16.mxu0 0
        %1361 = vmatpush1.bf16.msra.mxu0 0
        %1362 = vmatprep.subr.bf16.mxu0 0
        %1363 = vmatpush1.bf16.msra.mxu0 0
        %1364 = vmatprep.subr.bf16.mxu0 0
        %1365 = vmatpush1.bf16.msra.mxu0 0
        %1366 = vmatprep.subr.bf16.mxu0 0
        %1367 = vmatpush1.bf16.msra.mxu0 0
        %1368 = vmatprep.subr.bf16.mxu0 0
        %1369 = vmatpush1.bf16.msra.mxu0 0
        %1370 = vmatprep.subr.bf16.mxu0 0
        %1371 = vmatpush1.bf16.msra.mxu0 0
        %1372 = vmatprep.subr.bf16.mxu0 0
        %1373 = vmatpush1.bf16.msra.mxu0 0
        %1374 = vmatprep.subr.bf16.mxu0 0
        %1375 = vmatpush1.bf16.msra.mxu0 0
        %1376 = vmatprep.subr.bf16.mxu0 0
        %1377 = vmatpush1.bf16.msra.mxu0 0
        %1378 = vmatprep.subr.bf16.mxu0 0
        %1379 = vmatpush1.bf16.msra.mxu0 0
        %1380 = vmatprep.subr.bf16.mxu0 0
        %1381 = vmatpush1.bf16.msra.mxu0 0
        %1382 = vmatprep.mubr.bf16.mxu0 0
        %1383 = vmatmul.mubr.bf16.gmra.mrb[0].mxu0 %v247
        %v1384 = vpop.f32.mrb[0].mxu0
        %v1385 = vadd.f32 %v1274, %v1384
        %v1386 = vpop.f32.mrb[0].mxu0
        %v1387 = vadd.f32 %v1274, %v1386
        %v1388 = vpop.f32.mrb[0].mxu0
        %v1389 = vadd.f32 %v1274, %v1388
        %v1390 = vpop.f32.mrb[0].mxu0
        %v1391 = vadd.f32 %v1274, %v1390
        %1392 = vdwg.mxu0
        %1393 = vmatprep.subr.bf16.mxu0 %v1311
        %1394 = vmatpush1.bf16.msra.mxu0 %v1310
        %1395 = vmatprep.subr.bf16.mxu0 %v1339
        %1396 = vmatpush1.bf16.msra.mxu0 %v1336
        %1397 = vmatprep.subr.bf16.mxu0 0
        %1398 = vmatpush1.bf16.msra.mxu0 0
        %1399 = vmatprep.subr.bf16.mxu0 0
        %1400 = vmatpush1.bf16.msra.mxu0 0
        %1401 = vmatprep.subr.bf16.mxu0 0
        %1402 = vmatpush1.bf16.msra.mxu0 0
        %1403 = vmatprep.subr.bf16.mxu0 0
        %1404 = vmatpush1.bf16.msra.mxu0 0
        %1405 = vmatprep.subr.bf16.mxu0 0
        %1406 = vmatpush1.bf16.msra.mxu0 0
        %1407 = vmatprep.subr.bf16.mxu0 0
        %1408 = vmatpush1.bf16.msra.mxu0 0
        %1409 = vmatprep.subr.bf16.mxu0 0
        %1410 = vmatpush1.bf16.msra.mxu0 0
        %1411 = vmatprep.subr.bf16.mxu0 0
        %1412 = vmatpush1.bf16.msra.mxu0 0
        %1413 = vmatprep.subr.bf16.mxu0 0
        %1414 = vmatpush1.bf16.msra.mxu0 0
        %1415 = vmatprep.subr.bf16.mxu0 0
        %1416 = vmatpush1.bf16.msra.mxu0 0
        %1417 = vmatprep.subr.bf16.mxu0 0
        %1418 = vmatpush1.bf16.msra.mxu0 0
        %1419 = vmatprep.subr.bf16.mxu0 0
        %1420 = vmatpush1.bf16.msra.mxu0 0
        %1421 = vmatprep.subr.bf16.mxu0 0
        %1422 = vmatpush1.bf16.msra.mxu0 0
        %1423 = vmatprep.subr.bf16.mxu0 0
        %1424 = vmatpush1.bf16.msra.mxu0 0
        %1425 = vmatprep.mubr.bf16.mxu0 0
        %1426 = vmatmul.mubr.bf16.gmra.mrb[0].mxu0 %v247
        %v1427 = vpop.f32.mrb[0].mxu0
        %v1428 = vadd.f32 %v1274, %v1427
        %v1429 = vpop.f32.mrb[0].mxu0
        %v1430 = vadd.f32 %v1274, %v1429
        %v1431 = vpop.f32.mrb[0].mxu0
        %v1432 = vadd.f32 %v1274, %v1431
        %v1433 = vpop.f32.mrb[0].mxu0
        %v1434 = vadd.f32 %v1274, %v1433
        %1435 = vdwg.mxu0
        %1436 = vmatprep.subr.bf16.mxu0 %v1313
        %1437 = vmatpush1.bf16.msra.mxu0 %v1312
        %1438 = vmatprep.subr.bf16.mxu0 %v1345
        %1439 = vmatpush1.bf16.msra.mxu0 %v1342
        %1440 = vmatprep.subr.bf16.mxu0 0
        %1441 = vmatpush1.bf16.msra.mxu0 0
        %1442 = vmatprep.subr.bf16.mxu0 0
        %1443 = vmatpush1.bf16.msra.mxu0 0
        %1444 = vmatprep.subr.bf16.mxu0 0
        %1445 = vmatpush1.bf16.msra.mxu0 0
        %1446 = vmatprep.subr.bf16.mxu0 0
        %1447 = vmatpush1.bf16.msra.mxu0 0
        %1448 = vmatprep.subr.bf16.mxu0 0
        %1449 = vmatpush1.bf16.msra.mxu0 0
        %1450 = vmatprep.subr.bf16.mxu0 0
        %1451 = vmatpush1.bf16.msra.mxu0 0
        %1452 = vmatprep.subr.bf16.mxu0 0
        %1453 = vmatpush1.bf16.msra.mxu0 0
        %1454 = vmatprep.subr.bf16.mxu0 0
        %1455 = vmatpush1.bf16.msra.mxu0 0
        %1456 = vmatprep.subr.bf16.mxu0 0
        %1457 = vmatpush1.bf16.msra.mxu0 0
        %1458 = vmatprep.subr.bf16.mxu0 0
        %1459 = vmatpush1.bf16.msra.mxu0 0
        %1460 = vmatprep.subr.bf16.mxu0 0
        %1461 = vmatpush1.bf16.msra.mxu0 0
        %1462 = vmatprep.subr.bf16.mxu0 0
        %1463 = vmatpush1.bf16.msra.mxu0 0
        %1464 = vmatprep.subr.bf16.mxu0 0
        %1465 = vmatpush1.bf16.msra.mxu0 0
        %1466 = vmatprep.subr.bf16.mxu0 0
        %1467 = vmatpush1.bf16.msra.mxu0 0
        %1468 = vmatprep.mubr.bf16.mxu0 0
        %1469 = vmatmul.mubr.bf16.gmra.mrb[0].mxu0 %v247
        %v1470 = vpop.f32.mrb[0].mxu0
        %v1471 = vadd.f32 %v1274, %v1470
        %v1472 = vpop.f32.mrb[0].mxu0
        %v1473 = vadd.f32 %v1274, %v1472
        %v1474 = vpop.f32.mrb[0].mxu0
        %v1475 = vadd.f32 %v1274, %v1474
        %v1476 = vpop.f32.mrb[0].mxu0
        %v1477 = vadd.f32 %v1274, %v1476
        %1478 = vdwg.mxu0
        %1479 = vmatprep.subr.bf16.mxu0 0
        %1480 = vmatpush1.bf16.msra.mxu0 %v1314
        %1481 = vmatprep.subr.bf16.mxu0 0
        %1482 = vmatpush1.bf16.msra.mxu0 %v1348
        %1483 = vmatprep.subr.bf16.mxu0 0
        %1484 = vmatpush1.bf16.msra.mxu0 0
        %1485 = vmatprep.subr.bf16.mxu0 0
        %1486 = vmatpush1.bf16.msra.mxu0 0
        %1487 = vmatprep.subr.bf16.mxu0 0
        %1488 = vmatpush1.bf16.msra.mxu0 0
        %1489 = vmatprep.subr.bf16.mxu0 0
        %1490 = vmatpush1.bf16.msra.mxu0 0
        %1491 = vmatprep.subr.bf16.mxu0 0
        %1492 = vmatpush1.bf16.msra.mxu0 0
        %1493 = vmatprep.subr.bf16.mxu0 0
        %1494 = vmatpush1.bf16.msra.mxu0 0
        %1495 = vmatprep.subr.bf16.mxu0 0
        %1496 = vmatpush1.bf16.msra.mxu0 0
        %1497 = vmatprep.subr.bf16.mxu0 0
        %1498 = vmatpush1.bf16.msra.mxu0 0
        %1499 = vmatprep.subr.bf16.mxu0 0
        %1500 = vmatpush1.bf16.msra.mxu0 0
        %1501 = vmatprep.subr.bf16.mxu0 0
        %1502 = vmatpush1.bf16.msra.mxu0 0
        %1503 = vmatprep.subr.bf16.mxu0 0
        %1504 = vmatpush1.bf16.msra.mxu0 0
        %1505 = vmatprep.subr.bf16.mxu0 0
        %1506 = vmatpush1.bf16.msra.mxu0 0
        %1507 = vmatprep.subr.bf16.mxu0 0
        %1508 = vmatpush1.bf16.msra.mxu0 0
        %1509 = vmatprep.subr.bf16.mxu0 0
        %1510 = vmatpush1.bf16.msra.mxu0 0
        %1511 = vmatprep.mubr.bf16.mxu0 0
        %1512 = vmatmul.mubr.bf16.gmra.mrb[0].mxu0 %v247
        %v1513 = vpop.f32.mrb[0].mxu0
        %v1514 = vadd.f32 %v1274, %v1513
        %v1515 = vpop.f32.mrb[0].mxu0
        %v1516 = vpop.f32.mrb[0].mxu0
        %v1517 = vadd.f32 %v1274, %v1516
        %v1518 = vpop.f32.mrb[0].mxu0
        %1519 = vdwg.mxu0
        %v1520 = vxor.u32 %v1385, 2147483648
        %v1521 = vxor.u32 %v1387, 2147483648
        %v1522 = vxor.u32 %v1428, 2147483648
        %v1523 = vxor.u32 %v1430, 2147483648
        %v1524 = vxor.u32 %v1471, 2147483648
        %v1525 = vxor.u32 %v1473, 2147483648
        %v1526 = vxor.u32 %v1514, 2147483648
        %v1527 = vxor.u32 %v1389, 2147483648
        %v1528 = vxor.u32 %v1391, 2147483648
        %v1529 = vxor.u32 %v1432, 2147483648
        %v1530 = vxor.u32 %v1434, 2147483648
        %v1531 = vxor.u32 %v1475, 2147483648
        %v1532 = vxor.u32 %v1477, 2147483648
        %v1533 = vxor.u32 %v1517, 2147483648
        %v1534 = vmul.f32 %v1520, 1.442695
        %v1535 = vpow.pop %v1534
        %v1536 = vmul.f32 %v1521, 1.442695
        %v1537 = vpow.pop %v1536
        %v1538 = vmul.f32 %v1522, 1.442695
        %v1539 = vpow.pop %v1538
        %v1540 = vmul.f32 %v1523, 1.442695
        %v1541 = vpow.pop %v1540
        %v1542 = vmul.f32 %v1524, 1.442695
        %v1543 = vpow.pop %v1542
        %v1544 = vmul.f32 %v1525, 1.442695
        %v1545 = vpow.pop %v1544
        %v1546 = vmul.f32 %v1526, 1.442695
        %v1547 = vpow.pop %v1546
        %v1548 = vmul.f32 %v1527, 1.442695
        %v1549 = vpow.pop %v1548
        %v1550 = vmul.f32 %v1528, 1.442695
        %v1551 = vpow.pop %v1550
        %v1552 = vmul.f32 %v1529, 1.442695
        %v1553 = vpow.pop %v1552
        %v1554 = vmul.f32 %v1530, 1.442695
        %v1555 = vpow.pop %v1554
        %v1556 = vmul.f32 %v1531, 1.442695
        %v1557 = vpow.pop %v1556
        %v1558 = vmul.f32 %v1532, 1.442695
        %v1559 = vpow.pop %v1558
        %v1560 = vmul.f32 %v1533, 1.442695
        %v1561 = vpow.pop %v1560
        %v1562 = vadd.f32 %v1535, 1.0
        %v1563 = vadd.f32 %v1537, 1.0
        %v1564 = vadd.f32 %v1539, 1.0
        %v1565 = vadd.f32 %v1541, 1.0
        %v1566 = vadd.f32 %v1543, 1.0
        %v1567 = vadd.f32 %v1545, 1.0
        %v1568 = vadd.f32 %v1547, 1.0
        %v1569 = vadd.f32 %v1549, 1.0
        %v1570 = vadd.f32 %v1551, 1.0
        %v1571 = vadd.f32 %v1553, 1.0
        %v1572 = vadd.f32 %v1555, 1.0
        %v1573 = vadd.f32 %v1557, 1.0
        %v1574 = vadd.f32 %v1559, 1.0
        %v1575 = vadd.f32 %v1561, 1.0
        %v1576 = vrcp.pop %v1562
        %v1577 = vmul.f32 1.0, %v1576
        %v1578 = vrcp.pop %v1563
        %v1579 = vmul.f32 1.0, %v1578
        %v1580 = vrcp.pop %v1564
        %v1581 = vmul.f32 1.0, %v1580
        %v1582 = vrcp.pop %v1565
        %v1583 = vmul.f32 1.0, %v1582
        %v1584 = vrcp.pop %v1566
        %v1585 = vmul.f32 1.0, %v1584
        %v1586 = vrcp.pop %v1567
        %v1587 = vmul.f32 1.0, %v1586
        %v1588 = vrcp.pop %v1568
        %v1589 = vmul.f32 1.0, %v1588
        %v1590 = vrcp.pop %v1569
        %v1591 = vmul.f32 1.0, %v1590
        %v1592 = vrcp.pop %v1570
        %v1593 = vmul.f32 1.0, %v1592
        %v1594 = vrcp.pop %v1571
        %v1595 = vmul.f32 1.0, %v1594
        %v1596 = vrcp.pop %v1572
        %v1597 = vmul.f32 1.0, %v1596
        %v1598 = vrcp.pop %v1573
        %v1599 = vmul.f32 1.0, %v1598
        %v1600 = vrcp.pop %v1574
        %v1601 = vmul.f32 1.0, %v1600
        %v1602 = vrcp.pop %v1575
        %v1603 = vmul.f32 1.0, %v1602
        %s1604 = scalar_lea.vmem %s165, 168 [#allocation6]
        %1605 = vst [vmem:[%s1604] sm:$0xff] %v1577
        %1606 = vst [vmem:[%s1604 + $0x8] sm:$0xff] %v1579
        %1607 = vst [vmem:[%s1604 + $0x10] sm:$0xff] %v1581
        %1608 = vst [vmem:[%s1604 + $0x18] sm:$0xff] %v1583
        %1609 = vst [vmem:[%s1604 + $0x20] sm:$0xff] %v1585
        %1610 = vst [vmem:[%s1604 + $0x28] sm:$0xff] %v1587
        %1611 = vst [vmem:[%s1604 + $0x30] sm:$0xff] %v1589
        %1612 = vst [vmem:[%s1604 + $0x188] sm:$0xff] %v1591
        %1613 = vst [vmem:[%s1604 + $0x190] sm:$0xff] %v1593
        %1614 = vst [vmem:[%s1604 + $0x198] sm:$0xff] %v1595
        %1615 = vst [vmem:[%s1604 + $0x1a0] sm:$0xff] %v1597
        %1616 = vst [vmem:[%s1604 + $0x1a8] sm:$0xff] %v1599
        %1617 = vst [vmem:[%s1604 + $0x1b0] sm:$0xff] %v1601
        %1618 = vst [vmem:[%s1604 + $0x1b8] sm:$0xff] %v1603
        %s1619 = scalar_lea.vmem %s146, 336 [#allocation4]
        %v1620 = vld [vmem:[%s1619] sm:$0xff]
        %v1621 = vld [vmem:[%s1619 + $0x8] sm:$0xff]
        %v1622 = vld [vmem:[%s1619 + $0x10] sm:$0xff]
        %v1623 = vld [vmem:[%s1619 + $0x18] sm:$0xf]
        %v1624 = vld [vmem:[%s1619 + $0x1c] sm:$0xff]
        %v1625 = vld [vmem:[%s1619 + $0x24] sm:$0xff]
        %v1626 = vld [vmem:[%s1619 + $0x2c] sm:$0xff]
        %v1627 = vld [vmem:[%s1619 + $0x34] sm:$0xf]
        %v1628 = vld [vmem:[%s1619 + $0x38] sm:$0xff]
        %v1629 = vld [vmem:[%s1619 + $0x40] sm:$0xff]
        %v1630 = vld [vmem:[%s1619 + $0x48] sm:$0xff]
        %v1631 = vld [vmem:[%s1619 + $0x50] sm:$0xf]
        %s1632 = sadd.s32 %s183, 4
        %s1633 = sld [smem:[#allocation3 + %s1632]]
        %v1634 = vstv %s1633
        %v1647 = vunpack.c.l.b16 %v1620
        %v1648 = vunpack.c.h.b16 %v1620
        %v1649 = vunpack.c.l.b16 %v1621
        %v1650 = vunpack.c.h.b16 %v1621
        %v1651 = vunpack.c.l.b16 %v1622
        %v1652 = vunpack.c.h.b16 %v1622
        %v1653 = vunpack.c.l.b16 %v1623
        %v1654 = vunpack.c.l.b16 %v1624
        %v1655 = vunpack.c.h.b16 %v1624
        %v1656 = vunpack.c.l.b16 %v1625
        %v1657 = vunpack.c.h.b16 %v1625
        %v1658 = vunpack.c.l.b16 %v1626
        %v1659 = vunpack.c.h.b16 %v1626
        %v1660 = vunpack.c.l.b16 %v1627
        %v1661 = vunpack.c.l.b16 %v1628
        %v1662 = vunpack.c.h.b16 %v1628
        %v1663 = vunpack.c.l.b16 %v1629
        %v1664 = vunpack.c.h.b16 %v1629
        %v1665 = vunpack.c.l.b16 %v1630
        %v1666 = vunpack.c.h.b16 %v1630
        %v1667 = vunpack.c.l.b16 %v1631
        %v1668 = vpack.c.b16 %v1654, %v1647
        %v1669 = vpack.c.b16 %v1655, %v1648
        %v1670 = vpack.c.b16 %v1656, %v1649
        %v1671 = vpack.c.b16 %v1657, %v1650
        %v1672 = vpack.c.b16 %v1658, %v1651
        %v1673 = vpack.c.b16 %v1659, %v1652
        %v1674 = vpack.c.b16 %v1660, %v1653
        %v1675 = vpack.c.b16 %v1661, %v1661
        %v1676 = vpack.c.b16 %v1662, %v1662
        %v1677 = vpack.c.b16 %v1663, %v1663
        %v1678 = vpack.c.b16 %v1664, %v1664
        %v1679 = vpack.c.b16 %v1665, %v1665
        %v1680 = vpack.c.b16 %v1666, %v1666
        %v1681 = vpack.c.b16 %v1667, %v1667
        %v1690 = vsel %vm249, %v1675, 0
        %v1693 = vsel %vm249, %v1676, 0
        %v1696 = vsel %vm249, %v1677, 0
        %v1699 = vsel %vm249, %v1678, 0
        %v1702 = vsel %vm249, %v1679, 0
        %v1705 = vsel %vm249, %v1680, 0
        %v1708 = vsel %vm249, %v1681, 0
        %1710 = vmatprep.subr.bf16.mxu0 %v1669
        %1711 = vmatpush1.bf16.msra.mxu0 %v1668
        %1712 = vmatprep.subr.bf16.mxu0 %v1693
        %1713 = vmatpush1.bf16.msra.mxu0 %v1690
        %1714 = vmatprep.subr.bf16.mxu0 0
        %1715 = vmatpush1.bf16.msra.mxu0 0
        %1716 = vmatprep.subr.bf16.mxu0 0
        %1717 = vmatpush1.bf16.msra.mxu0 0
        %1718 = vmatprep.subr.bf16.mxu0 0
        %1719 = vmatpush1.bf16.msra.mxu0 0
        %1720 = vmatprep.subr.bf16.mxu0 0
        %1721 = vmatpush1.bf16.msra.mxu0 0
        %1722 = vmatprep.subr.bf16.mxu0 0
        %1723 = vmatpush1.bf16.msra.mxu0 0
        %1724 = vmatprep.subr.bf16.mxu0 0
        %1725 = vmatpush1.bf16.msra.mxu0 0
        %1726 = vmatprep.subr.bf16.mxu0 0
        %1727 = vmatpush1.bf16.msra.mxu0 0
        %1728 = vmatprep.subr.bf16.mxu0 0
        %1729 = vmatpush1.bf16.msra.mxu0 0
        %1730 = vmatprep.subr.bf16.mxu0 0
        %1731 = vmatpush1.bf16.msra.mxu0 0
        %1732 = vmatprep.subr.bf16.mxu0 0
        %1733 = vmatpush1.bf16.msra.mxu0 0
        %1734 = vmatprep.subr.bf16.mxu0 0
        %1735 = vmatpush1.bf16.msra.mxu0 0
        %1736 = vmatprep.subr.bf16.mxu0 0
        %1737 = vmatpush1.bf16.msra.mxu0 0
        %1738 = vmatprep.subr.bf16.mxu0 0
        %1739 = vmatpush1.bf16.msra.mxu0 0
        %1740 = vmatprep.subr.bf16.mxu0 0
        %1741 = vmatpush1.bf16.msra.mxu0 0
        %1742 = vmatprep.mubr.bf16.mxu0 0
        %1743 = vmatmul.mubr.bf16.gmra.mrb[0].mxu0 %v247
        %v1744 = vpop.f32.mrb[0].mxu0
        %v1745 = vadd.f32 %v1634, %v1744
        %v1746 = vpop.f32.mrb[0].mxu0
        %v1747 = vadd.f32 %v1634, %v1746
        %v1748 = vpop.f32.mrb[0].mxu0
        %v1749 = vadd.f32 %v1634, %v1748
        %v1750 = vpop.f32.mrb[0].mxu0
        %v1751 = vadd.f32 %v1634, %v1750
        %1752 = vdwg.mxu0
        %1753 = vmatprep.subr.bf16.mxu0 %v1671
        %1754 = vmatpush1.bf16.msra.mxu0 %v1670
        %1755 = vmatprep.subr.bf16.mxu0 %v1699
        %1756 = vmatpush1.bf16.msra.mxu0 %v1696
        %1757 = vmatprep.subr.bf16.mxu0 0
        %1758 = vmatpush1.bf16.msra.mxu0 0
        %1759 = vmatprep.subr.bf16.mxu0 0
        %1760 = vmatpush1.bf16.msra.mxu0 0
        %1761 = vmatprep.subr.bf16.mxu0 0
        %1762 = vmatpush1.bf16.msra.mxu0 0
        %1763 = vmatprep.subr.bf16.mxu0 0
        %1764 = vmatpush1.bf16.msra.mxu0 0
        %1765 = vmatprep.subr.bf16.mxu0 0
        %1766 = vmatpush1.bf16.msra.mxu0 0
        %1767 = vmatprep.subr.bf16.mxu0 0
        %1768 = vmatpush1.bf16.msra.mxu0 0
        %1769 = vmatprep.subr.bf16.mxu0 0
        %1770 = vmatpush1.bf16.msra.mxu0 0
        %1771 = vmatprep.subr.bf16.mxu0 0
        %1772 = vmatpush1.bf16.msra.mxu0 0
        %1773 = vmatprep.subr.bf16.mxu0 0
        %1774 = vmatpush1.bf16.msra.mxu0 0
        %1775 = vmatprep.subr.bf16.mxu0 0
        %1776 = vmatpush1.bf16.msra.mxu0 0
        %1777 = vmatprep.subr.bf16.mxu0 0
        %1778 = vmatpush1.bf16.msra.mxu0 0
        %1779 = vmatprep.subr.bf16.mxu0 0
        %1780 = vmatpush1.bf16.msra.mxu0 0
        %1781 = vmatprep.subr.bf16.mxu0 0
        %1782 = vmatpush1.bf16.msra.mxu0 0
        %1783 = vmatprep.subr.bf16.mxu0 0
        %1784 = vmatpush1.bf16.msra.mxu0 0
        %1785 = vmatprep.mubr.bf16.mxu0 0
        %1786 = vmatmul.mubr.bf16.gmra.mrb[0].mxu0 %v247
        %v1787 = vpop.f32.mrb[0].mxu0
        %v1788 = vadd.f32 %v1634, %v1787
        %v1789 = vpop.f32.mrb[0].mxu0
        %v1790 = vadd.f32 %v1634, %v1789
        %v1791 = vpop.f32.mrb[0].mxu0
        %v1792 = vadd.f32 %v1634, %v1791
        %v1793 = vpop.f32.mrb[0].mxu0
        %v1794 = vadd.f32 %v1634, %v1793
        %1795 = vdwg.mxu0
        %1796 = vmatprep.subr.bf16.mxu0 %v1673
        %1797 = vmatpush1.bf16.msra.mxu0 %v1672
        %1798 = vmatprep.subr.bf16.mxu0 %v1705
        %1799 = vmatpush1.bf16.msra.mxu0 %v1702
        %1800 = vmatprep.subr.bf16.mxu0 0
        %1801 = vmatpush1.bf16.msra.mxu0 0
        %1802 = vmatprep.subr.bf16.mxu0 0
        %1803 = vmatpush1.bf16.msra.mxu0 0
        %1804 = vmatprep.subr.bf16.mxu0 0
        %1805 = vmatpush1.bf16.msra.mxu0 0
        %1806 = vmatprep.subr.bf16.mxu0 0
        %1807 = vmatpush1.bf16.msra.mxu0 0
        %1808 = vmatprep.subr.bf16.mxu0 0
        %1809 = vmatpush1.bf16.msra.mxu0 0
        %1810 = vmatprep.subr.bf16.mxu0 0
        %1811 = vmatpush1.bf16.msra.mxu0 0
        %1812 = vmatprep.subr.bf16.mxu0 0
        %1813 = vmatpush1.bf16.msra.mxu0 0
        %1814 = vmatprep.subr.bf16.mxu0 0
        %1815 = vmatpush1.bf16.msra.mxu0 0
        %1816 = vmatprep.subr.bf16.mxu0 0
        %1817 = vmatpush1.bf16.msra.mxu0 0
        %1818 = vmatprep.subr.bf16.mxu0 0
        %1819 = vmatpush1.bf16.msra.mxu0 0
        %1820 = vmatprep.subr.bf16.mxu0 0
        %1821 = vmatpush1.bf16.msra.mxu0 0
        %1822 = vmatprep.subr.bf16.mxu0 0
        %1823 = vmatpush1.bf16.msra.mxu0 0
        %1824 = vmatprep.subr.bf16.mxu0 0
        %1825 = vmatpush1.bf16.msra.mxu0 0
        %1826 = vmatprep.subr.bf16.mxu0 0
        %1827 = vmatpush1.bf16.msra.mxu0 0
        %1828 = vmatprep.mubr.bf16.mxu0 0
        %1829 = vmatmul.mubr.bf16.gmra.mrb[0].mxu0 %v247
        %v1830 = vpop.f32.mrb[0].mxu0
        %v1831 = vadd.f32 %v1634, %v1830
        %v1832 = vpop.f32.mrb[0].mxu0
        %v1833 = vadd.f32 %v1634, %v1832
        %v1834 = vpop.f32.mrb[0].mxu0
        %v1835 = vadd.f32 %v1634, %v1834
        %v1836 = vpop.f32.mrb[0].mxu0
        %v1837 = vadd.f32 %v1634, %v1836
        %1838 = vdwg.mxu0
        %1839 = vmatprep.subr.bf16.mxu0 0
        %1840 = vmatpush1.bf16.msra.mxu0 %v1674
        %1841 = vmatprep.subr.bf16.mxu0 0
        %1842 = vmatpush1.bf16.msra.mxu0 %v1708
        %1843 = vmatprep.subr.bf16.mxu0 0
        %1844 = vmatpush1.bf16.msra.mxu0 0
        %1845 = vmatprep.subr.bf16.mxu0 0
        %1846 = vmatpush1.bf16.msra.mxu0 0
        %1847 = vmatprep.subr.bf16.mxu0 0
        %1848 = vmatpush1.bf16.msra.mxu0 0
        %1849 = vmatprep.subr.bf16.mxu0 0
        %1850 = vmatpush1.bf16.msra.mxu0 0
        %1851 = vmatprep.subr.bf16.mxu0 0
        %1852 = vmatpush1.bf16.msra.mxu0 0
        %1853 = vmatprep.subr.bf16.mxu0 0
        %1854 = vmatpush1.bf16.msra.mxu0 0
        %1855 = vmatprep.subr.bf16.mxu0 0
        %1856 = vmatpush1.bf16.msra.mxu0 0
        %1857 = vmatprep.subr.bf16.mxu0 0
        %1858 = vmatpush1.bf16.msra.mxu0 0
        %1859 = vmatprep.subr.bf16.mxu0 0
        %1860 = vmatpush1.bf16.msra.mxu0 0
        %1861 = vmatprep.subr.bf16.mxu0 0
        %1862 = vmatpush1.bf16.msra.mxu0 0
        %1863 = vmatprep.subr.bf16.mxu0 0
        %1864 = vmatpush1.bf16.msra.mxu0 0
        %1865 = vmatprep.subr.bf16.mxu0 0
        %1866 = vmatpush1.bf16.msra.mxu0 0
        %1867 = vmatprep.subr.bf16.mxu0 0
        %1868 = vmatpush1.bf16.msra.mxu0 0
        %1869 = vmatprep.subr.bf16.mxu0 0
        %1870 = vmatpush1.bf16.msra.mxu0 0
        %1871 = vmatprep.mubr.bf16.mxu0 0
        %1872 = vmatmul.mubr.bf16.gmra.mrb[0].mxu0 %v247
        %v1873 = vpop.f32.mrb[0].mxu0
        %v1874 = vadd.f32 %v1634, %v1873
        %v1875 = vpop.f32.mrb[0].mxu0
        %v1876 = vpop.f32.mrb[0].mxu0
        %v1877 = vadd.f32 %v1634, %v1876
        %v1878 = vpop.f32.mrb[0].mxu0
        %1879 = vdwg.mxu0
        %v1880 = vxor.u32 %v1745, 2147483648
        %v1881 = vxor.u32 %v1747, 2147483648
        %v1882 = vxor.u32 %v1788, 2147483648
        %v1883 = vxor.u32 %v1790, 2147483648
        %v1884 = vxor.u32 %v1831, 2147483648
        %v1885 = vxor.u32 %v1833, 2147483648
        %v1886 = vxor.u32 %v1874, 2147483648
        %v1887 = vxor.u32 %v1749, 2147483648
        %v1888 = vxor.u32 %v1751, 2147483648
        %v1889 = vxor.u32 %v1792, 2147483648
        %v1890 = vxor.u32 %v1794, 2147483648
        %v1891 = vxor.u32 %v1835, 2147483648
        %v1892 = vxor.u32 %v1837, 2147483648
        %v1893 = vxor.u32 %v1877, 2147483648
        %v1894 = vmul.f32 %v1880, 1.442695
        %v1895 = vpow.pop %v1894
        %v1896 = vmul.f32 %v1881, 1.442695
        %v1897 = vpow.pop %v1896
        %v1898 = vmul.f32 %v1882, 1.442695
        %v1899 = vpow.pop %v1898
        %v1900 = vmul.f32 %v1883, 1.442695
        %v1901 = vpow.pop %v1900
        %v1902 = vmul.f32 %v1884, 1.442695
        %v1903 = vpow.pop %v1902
        %v1904 = vmul.f32 %v1885, 1.442695
        %v1905 = vpow.pop %v1904
        %v1906 = vmul.f32 %v1886, 1.442695
        %v1907 = vpow.pop %v1906
        %v1908 = vmul.f32 %v1887, 1.442695
        %v1909 = vpow.pop %v1908
        %v1910 = vmul.f32 %v1888, 1.442695
        %v1911 = vpow.pop %v1910
        %v1912 = vmul.f32 %v1889, 1.442695
        %v1913 = vpow.pop %v1912
        %v1914 = vmul.f32 %v1890, 1.442695
        %v1915 = vpow.pop %v1914
        %v1916 = vmul.f32 %v1891, 1.442695
        %v1917 = vpow.pop %v1916
        %v1918 = vmul.f32 %v1892, 1.442695
        %v1919 = vpow.pop %v1918
        %v1920 = vmul.f32 %v1893, 1.442695
        %v1921 = vpow.pop %v1920
        %v1922 = vadd.f32 %v1895, 1.0
        %v1923 = vadd.f32 %v1897, 1.0
        %v1924 = vadd.f32 %v1899, 1.0
        %v1925 = vadd.f32 %v1901, 1.0
        %v1926 = vadd.f32 %v1903, 1.0
        %v1927 = vadd.f32 %v1905, 1.0
        %v1928 = vadd.f32 %v1907, 1.0
        %v1929 = vadd.f32 %v1909, 1.0
        %v1930 = vadd.f32 %v1911, 1.0
        %v1931 = vadd.f32 %v1913, 1.0
        %v1932 = vadd.f32 %v1915, 1.0
        %v1933 = vadd.f32 %v1917, 1.0
        %v1934 = vadd.f32 %v1919, 1.0
        %v1935 = vadd.f32 %v1921, 1.0
        %v1936 = vrcp.pop %v1922
        %v1937 = vmul.f32 1.0, %v1936
        %v1938 = vrcp.pop %v1923
        %v1939 = vmul.f32 1.0, %v1938
        %v1940 = vrcp.pop %v1924
        %v1941 = vmul.f32 1.0, %v1940
        %v1942 = vrcp.pop %v1925
        %v1943 = vmul.f32 1.0, %v1942
        %v1944 = vrcp.pop %v1926
        %v1945 = vmul.f32 1.0, %v1944
        %v1946 = vrcp.pop %v1927
        %v1947 = vmul.f32 1.0, %v1946
        %v1948 = vrcp.pop %v1928
        %v1949 = vmul.f32 1.0, %v1948
        %v1950 = vrcp.pop %v1929
        %v1951 = vmul.f32 1.0, %v1950
        %v1952 = vrcp.pop %v1930
        %v1953 = vmul.f32 1.0, %v1952
        %v1954 = vrcp.pop %v1931
        %v1955 = vmul.f32 1.0, %v1954
        %v1956 = vrcp.pop %v1932
        %v1957 = vmul.f32 1.0, %v1956
        %v1958 = vrcp.pop %v1933
        %v1959 = vmul.f32 1.0, %v1958
        %v1960 = vrcp.pop %v1934
        %v1961 = vmul.f32 1.0, %v1960
        %v1962 = vrcp.pop %v1935
        %v1963 = vmul.f32 1.0, %v1962
        %s1964 = scalar_lea.vmem %s165, 224 [#allocation6]
        %1965 = vst [vmem:[%s1964] sm:$0xff] %v1937
        %1966 = vst [vmem:[%s1964 + $0x8] sm:$0xff] %v1939
        %1967 = vst [vmem:[%s1964 + $0x10] sm:$0xff] %v1941
        %1968 = vst [vmem:[%s1964 + $0x18] sm:$0xff] %v1943
        %1969 = vst [vmem:[%s1964 + $0x20] sm:$0xff] %v1945
        %1970 = vst [vmem:[%s1964 + $0x28] sm:$0xff] %v1947
        %1971 = vst [vmem:[%s1964 + $0x30] sm:$0xff] %v1949
        %1972 = vst [vmem:[%s1964 + $0x188] sm:$0xff] %v1951
        %1973 = vst [vmem:[%s1964 + $0x190] sm:$0xff] %v1953
        %1974 = vst [vmem:[%s1964 + $0x198] sm:$0xff] %v1955
        %1975 = vst [vmem:[%s1964 + $0x1a0] sm:$0xff] %v1957
        %1976 = vst [vmem:[%s1964 + $0x1a8] sm:$0xff] %v1959
        %1977 = vst [vmem:[%s1964 + $0x1b0] sm:$0xff] %v1961
        %1978 = vst [vmem:[%s1964 + $0x1b8] sm:$0xff] %v1963
        %s1979 = scalar_lea.vmem %s146, 420 [#allocation4]
        %v1980 = vld [vmem:[%s1979] sm:$0xff]
        %v1981 = vld [vmem:[%s1979 + $0x8] sm:$0xff]
        %v1982 = vld [vmem:[%s1979 + $0x10] sm:$0xff]
        %v1983 = vld [vmem:[%s1979 + $0x18] sm:$0xf]
        %v1984 = vld [vmem:[%s1979 + $0x1c] sm:$0xff]
        %v1985 = vld [vmem:[%s1979 + $0x24] sm:$0xff]
        %v1986 = vld [vmem:[%s1979 + $0x2c] sm:$0xff]
        %v1987 = vld [vmem:[%s1979 + $0x34] sm:$0xf]
        %v1988 = vld [vmem:[%s1979 + $0x38] sm:$0xff]
        %v1989 = vld [vmem:[%s1979 + $0x40] sm:$0xff]
        %v1990 = vld [vmem:[%s1979 + $0x48] sm:$0xff]
        %v1991 = vld [vmem:[%s1979 + $0x50] sm:$0xf]
        %s1992 = sadd.s32 %s183, 5
        %s1993 = sld [smem:[#allocation3 + %s1992]]
        %v1994 = vstv %s1993
        %v2007 = vunpack.c.l.b16 %v1980
        %v2008 = vunpack.c.h.b16 %v1980
        %v2009 = vunpack.c.l.b16 %v1981
        %v2010 = vunpack.c.h.b16 %v1981
        %v2011 = vunpack.c.l.b16 %v1982
        %v2012 = vunpack.c.h.b16 %v1982
        %v2013 = vunpack.c.l.b16 %v1983
        %v2014 = vunpack.c.l.b16 %v1984
        %v2015 = vunpack.c.h.b16 %v1984
        %v2016 = vunpack.c.l.b16 %v1985
        %v2017 = vunpack.c.h.b16 %v1985
        %v2018 = vunpack.c.l.b16 %v1986
        %v2019 = vunpack.c.h.b16 %v1986
        %v2020 = vunpack.c.l.b16 %v1987
        %v2021 = vunpack.c.l.b16 %v1988
        %v2022 = vunpack.c.h.b16 %v1988
        %v2023 = vunpack.c.l.b16 %v1989
        %v2024 = vunpack.c.h.b16 %v1989
        %v2025 = vunpack.c.l.b16 %v1990
        %v2026 = vunpack.c.h.b16 %v1990
        %v2027 = vunpack.c.l.b16 %v1991
        %v2028 = vpack.c.b16 %v2014, %v2007
        %v2029 = vpack.c.b16 %v2015, %v2008
        %v2030 = vpack.c.b16 %v2016, %v2009
        %v2031 = vpack.c.b16 %v2017, %v2010
        %v2032 = vpack.c.b16 %v2018, %v2011
        %v2033 = vpack.c.b16 %v2019, %v2012
        %v2034 = vpack.c.b16 %v2020, %v2013
        %v2035 = vpack.c.b16 %v2021, %v2021
        %v2036 = vpack.c.b16 %v2022, %v2022
        %v2037 = vpack.c.b16 %v2023, %v2023
        %v2038 = vpack.c.b16 %v2024, %v2024
        %v2039 = vpack.c.b16 %v2025, %v2025
        %v2040 = vpack.c.b16 %v2026, %v2026
        %v2041 = vpack.c.b16 %v2027, %v2027
        %v2050 = vsel %vm249, %v2035, 0
        %v2053 = vsel %vm249, %v2036, 0
        %v2056 = vsel %vm249, %v2037, 0
        %v2059 = vsel %vm249, %v2038, 0
        %v2062 = vsel %vm249, %v2039, 0
        %v2065 = vsel %vm249, %v2040, 0
        %v2068 = vsel %vm249, %v2041, 0
        %2070 = vmatprep.subr.bf16.mxu0 %v2029
        %2071 = vmatpush1.bf16.msra.mxu0 %v2028
        %2072 = vmatprep.subr.bf16.mxu0 %v2053
        %2073 = vmatpush1.bf16.msra.mxu0 %v2050
        %2074 = vmatprep.subr.bf16.mxu0 0
        %2075 = vmatpush1.bf16.msra.mxu0 0
        %2076 = vmatprep.subr.bf16.mxu0 0
        %2077 = vmatpush1.bf16.msra.mxu0 0
        %2078 = vmatprep.subr.bf16.mxu0 0
        %2079 = vmatpush1.bf16.msra.mxu0 0
        %2080 = vmatprep.subr.bf16.mxu0 0
        %2081 = vmatpush1.bf16.msra.mxu0 0
        %2082 = vmatprep.subr.bf16.mxu0 0
        %2083 = vmatpush1.bf16.msra.mxu0 0
        %2084 = vmatprep.subr.bf16.mxu0 0
        %2085 = vmatpush1.bf16.msra.mxu0 0
        %2086 = vmatprep.subr.bf16.mxu0 0
        %2087 = vmatpush1.bf16.msra.mxu0 0
        %2088 = vmatprep.subr.bf16.mxu0 0
        %2089 = vmatpush1.bf16.msra.mxu0 0
        %2090 = vmatprep.subr.bf16.mxu0 0
        %2091 = vmatpush1.bf16.msra.mxu0 0
        %2092 = vmatprep.subr.bf16.mxu0 0
        %2093 = vmatpush1.bf16.msra.mxu0 0
        %2094 = vmatprep.subr.bf16.mxu0 0
        %2095 = vmatpush1.bf16.msra.mxu0 0
        %2096 = vmatprep.subr.bf16.mxu0 0
        %2097 = vmatpush1.bf16.msra.mxu0 0
        %2098 = vmatprep.subr.bf16.mxu0 0
        %2099 = vmatpush1.bf16.msra.mxu0 0
        %2100 = vmatprep.subr.bf16.mxu0 0
        %2101 = vmatpush1.bf16.msra.mxu0 0
        %2102 = vmatprep.mubr.bf16.mxu0 0
        %2103 = vmatmul.mubr.bf16.gmra.mrb[0].mxu0 %v247
        %v2104 = vpop.f32.mrb[0].mxu0
        %v2105 = vadd.f32 %v1994, %v2104
        %v2106 = vpop.f32.mrb[0].mxu0
        %v2107 = vadd.f32 %v1994, %v2106
        %v2108 = vpop.f32.mrb[0].mxu0
        %v2109 = vadd.f32 %v1994, %v2108
        %v2110 = vpop.f32.mrb[0].mxu0
        %v2111 = vadd.f32 %v1994, %v2110
        %2112 = vdwg.mxu0
        %2113 = vmatprep.subr.bf16.mxu0 %v2031
        %2114 = vmatpush1.bf16.msra.mxu0 %v2030
        %2115 = vmatprep.subr.bf16.mxu0 %v2059
        %2116 = vmatpush1.bf16.msra.mxu0 %v2056
        %2117 = vmatprep.subr.bf16.mxu0 0
        %2118 = vmatpush1.bf16.msra.mxu0 0
        %2119 = vmatprep.subr.bf16.mxu0 0
        %2120 = vmatpush1.bf16.msra.mxu0 0
        %2121 = vmatprep.subr.bf16.mxu0 0
        %2122 = vmatpush1.bf16.msra.mxu0 0
        %2123 = vmatprep.subr.bf16.mxu0 0
        %2124 = vmatpush1.bf16.msra.mxu0 0
        %2125 = vmatprep.subr.bf16.mxu0 0
        %2126 = vmatpush1.bf16.msra.mxu0 0
        %2127 = vmatprep.subr.bf16.mxu0 0
        %2128 = vmatpush1.bf16.msra.mxu0 0
        %2129 = vmatprep.subr.bf16.mxu0 0
        %2130 = vmatpush1.bf16.msra.mxu0 0
        %2131 = vmatprep.subr.bf16.mxu0 0
        %2132 = vmatpush1.bf16.msra.mxu0 0
        %2133 = vmatprep.subr.bf16.mxu0 0
        %2134 = vmatpush1.bf16.msra.mxu0 0
        %2135 = vmatprep.subr.bf16.mxu0 0
        %2136 = vmatpush1.bf16.msra.mxu0 0
        %2137 = vmatprep.subr.bf16.mxu0 0
        %2138 = vmatpush1.bf16.msra.mxu0 0
        %2139 = vmatprep.subr.bf16.mxu0 0
        %2140 = vmatpush1.bf16.msra.mxu0 0
        %2141 = vmatprep.subr.bf16.mxu0 0
        %2142 = vmatpush1.bf16.msra.mxu0 0
        %2143 = vmatprep.subr.bf16.mxu0 0
        %2144 = vmatpush1.bf16.msra.mxu0 0
        %2145 = vmatprep.mubr.bf16.mxu0 0
        %2146 = vmatmul.mubr.bf16.gmra.mrb[0].mxu0 %v247
        %v2147 = vpop.f32.mrb[0].mxu0
        %v2148 = vadd.f32 %v1994, %v2147
        %v2149 = vpop.f32.mrb[0].mxu0
        %v2150 = vadd.f32 %v1994, %v2149
        %v2151 = vpop.f32.mrb[0].mxu0
        %v2152 = vadd.f32 %v1994, %v2151
        %v2153 = vpop.f32.mrb[0].mxu0
        %v2154 = vadd.f32 %v1994, %v2153
        %2155 = vdwg.mxu0
        %2156 = vmatprep.subr.bf16.mxu0 %v2033
        %2157 = vmatpush1.bf16.msra.mxu0 %v2032
        %2158 = vmatprep.subr.bf16.mxu0 %v2065
        %2159 = vmatpush1.bf16.msra.mxu0 %v2062
        %2160 = vmatprep.subr.bf16.mxu0 0
        %2161 = vmatpush1.bf16.msra.mxu0 0
        %2162 = vmatprep.subr.bf16.mxu0 0
        %2163 = vmatpush1.bf16.msra.mxu0 0
        %2164 = vmatprep.subr.bf16.mxu0 0
        %2165 = vmatpush1.bf16.msra.mxu0 0
        %2166 = vmatprep.subr.bf16.mxu0 0
        %2167 = vmatpush1.bf16.msra.mxu0 0
        %2168 = vmatprep.subr.bf16.mxu0 0
        %2169 = vmatpush1.bf16.msra.mxu0 0
        %2170 = vmatprep.subr.bf16.mxu0 0
        %2171 = vmatpush1.bf16.msra.mxu0 0
        %2172 = vmatprep.subr.bf16.mxu0 0
        %2173 = vmatpush1.bf16.msra.mxu0 0
        %2174 = vmatprep.subr.bf16.mxu0 0
        %2175 = vmatpush1.bf16.msra.mxu0 0
        %2176 = vmatprep.subr.bf16.mxu0 0
        %2177 = vmatpush1.bf16.msra.mxu0 0
        %2178 = vmatprep.subr.bf16.mxu0 0
        %2179 = vmatpush1.bf16.msra.mxu0 0
        %2180 = vmatprep.subr.bf16.mxu0 0
        %2181 = vmatpush1.bf16.msra.mxu0 0
        %2182 = vmatprep.subr.bf16.mxu0 0
        %2183 = vmatpush1.bf16.msra.mxu0 0
        %2184 = vmatprep.subr.bf16.mxu0 0
        %2185 = vmatpush1.bf16.msra.mxu0 0
        %2186 = vmatprep.subr.bf16.mxu0 0
        %2187 = vmatpush1.bf16.msra.mxu0 0
        %2188 = vmatprep.mubr.bf16.mxu0 0
        %2189 = vmatmul.mubr.bf16.gmra.mrb[0].mxu0 %v247
        %v2190 = vpop.f32.mrb[0].mxu0
        %v2191 = vadd.f32 %v1994, %v2190
        %v2192 = vpop.f32.mrb[0].mxu0
        %v2193 = vadd.f32 %v1994, %v2192
        %v2194 = vpop.f32.mrb[0].mxu0
        %v2195 = vadd.f32 %v1994, %v2194
        %v2196 = vpop.f32.mrb[0].mxu0
        %v2197 = vadd.f32 %v1994, %v2196
        %2198 = vdwg.mxu0
        %2199 = vmatprep.subr.bf16.mxu0 0
        %2200 = vmatpush1.bf16.msra.mxu0 %v2034
        %2201 = vmatprep.subr.bf16.mxu0 0
        %2202 = vmatpush1.bf16.msra.mxu0 %v2068
        %2203 = vmatprep.subr.bf16.mxu0 0
        %2204 = vmatpush1.bf16.msra.mxu0 0
        %2205 = vmatprep.subr.bf16.mxu0 0
        %2206 = vmatpush1.bf16.msra.mxu0 0
        %2207 = vmatprep.subr.bf16.mxu0 0
        %2208 = vmatpush1.bf16.msra.mxu0 0
        %2209 = vmatprep.subr.bf16.mxu0 0
        %2210 = vmatpush1.bf16.msra.mxu0 0
        %2211 = vmatprep.subr.bf16.mxu0 0
        %2212 = vmatpush1.bf16.msra.mxu0 0
        %2213 = vmatprep.subr.bf16.mxu0 0
        %2214 = vmatpush1.bf16.msra.mxu0 0
        %2215 = vmatprep.subr.bf16.mxu0 0
        %2216 = vmatpush1.bf16.msra.mxu0 0
        %2217 = vmatprep.subr.bf16.mxu0 0
        %2218 = vmatpush1.bf16.msra.mxu0 0
        %2219 = vmatprep.subr.bf16.mxu0 0
        %2220 = vmatpush1.bf16.msra.mxu0 0
        %2221 = vmatprep.subr.bf16.mxu0 0
        %2222 = vmatpush1.bf16.msra.mxu0 0
        %2223 = vmatprep.subr.bf16.mxu0 0
        %2224 = vmatpush1.bf16.msra.mxu0 0
        %2225 = vmatprep.subr.bf16.mxu0 0
        %2226 = vmatpush1.bf16.msra.mxu0 0
        %2227 = vmatprep.subr.bf16.mxu0 0
        %2228 = vmatpush1.bf16.msra.mxu0 0
        %2229 = vmatprep.subr.bf16.mxu0 0
        %2230 = vmatpush1.bf16.msra.mxu0 0
        %2231 = vmatprep.mubr.bf16.mxu0 0
        %2232 = vmatmul.mubr.bf16.gmra.mrb[0].mxu0 %v247
        %v2233 = vpop.f32.mrb[0].mxu0
        %v2234 = vadd.f32 %v1994, %v2233
        %v2235 = vpop.f32.mrb[0].mxu0
        %v2236 = vpop.f32.mrb[0].mxu0
        %v2237 = vadd.f32 %v1994, %v2236
        %v2238 = vpop.f32.mrb[0].mxu0
        %2239 = vdwg.mxu0
        %v2240 = vxor.u32 %v2105, 2147483648
        %v2241 = vxor.u32 %v2107, 2147483648
        %v2242 = vxor.u32 %v2148, 2147483648
        %v2243 = vxor.u32 %v2150, 2147483648
        %v2244 = vxor.u32 %v2191, 2147483648
        %v2245 = vxor.u32 %v2193, 2147483648
        %v2246 = vxor.u32 %v2234, 2147483648
        %v2247 = vxor.u32 %v2109, 2147483648
        %v2248 = vxor.u32 %v2111, 2147483648
        %v2249 = vxor.u32 %v2152, 2147483648
        %v2250 = vxor.u32 %v2154, 2147483648
        %v2251 = vxor.u32 %v2195, 2147483648
        %v2252 = vxor.u32 %v2197, 2147483648
        %v2253 = vxor.u32 %v2237, 2147483648
        %v2254 = vmul.f32 %v2240, 1.442695
        %v2255 = vpow.pop %v2254
        %v2256 = vmul.f32 %v2241, 1.442695
        %v2257 = vpow.pop %v2256
        %v2258 = vmul.f32 %v2242, 1.442695
        %v2259 = vpow.pop %v2258
        %v2260 = vmul.f32 %v2243, 1.442695
        %v2261 = vpow.pop %v2260
        %v2262 = vmul.f32 %v2244, 1.442695
        %v2263 = vpow.pop %v2262
        %v2264 = vmul.f32 %v2245, 1.442695
        %v2265 = vpow.pop %v2264
        %v2266 = vmul.f32 %v2246, 1.442695
        %v2267 = vpow.pop %v2266
        %v2268 = vmul.f32 %v2247, 1.442695
        %v2269 = vpow.pop %v2268
        %v2270 = vmul.f32 %v2248, 1.442695
        %v2271 = vpow.pop %v2270
        %v2272 = vmul.f32 %v2249, 1.442695
        %v2273 = vpow.pop %v2272
        %v2274 = vmul.f32 %v2250, 1.442695
        %v2275 = vpow.pop %v2274
        %v2276 = vmul.f32 %v2251, 1.442695
        %v2277 = vpow.pop %v2276
        %v2278 = vmul.f32 %v2252, 1.442695
        %v2279 = vpow.pop %v2278
        %v2280 = vmul.f32 %v2253, 1.442695
        %v2281 = vpow.pop %v2280
        %v2282 = vadd.f32 %v2255, 1.0
        %v2283 = vadd.f32 %v2257, 1.0
        %v2284 = vadd.f32 %v2259, 1.0
        %v2285 = vadd.f32 %v2261, 1.0
        %v2286 = vadd.f32 %v2263, 1.0
        %v2287 = vadd.f32 %v2265, 1.0
        %v2288 = vadd.f32 %v2267, 1.0
        %v2289 = vadd.f32 %v2269, 1.0
        %v2290 = vadd.f32 %v2271, 1.0
        %v2291 = vadd.f32 %v2273, 1.0
        %v2292 = vadd.f32 %v2275, 1.0
        %v2293 = vadd.f32 %v2277, 1.0
        %v2294 = vadd.f32 %v2279, 1.0
        %v2295 = vadd.f32 %v2281, 1.0
        %v2296 = vrcp.pop %v2282
        %v2297 = vmul.f32 1.0, %v2296
        %v2298 = vrcp.pop %v2283
        %v2299 = vmul.f32 1.0, %v2298
        %v2300 = vrcp.pop %v2284
        %v2301 = vmul.f32 1.0, %v2300
        %v2302 = vrcp.pop %v2285
        %v2303 = vmul.f32 1.0, %v2302
        %v2304 = vrcp.pop %v2286
        %v2305 = vmul.f32 1.0, %v2304
        %v2306 = vrcp.pop %v2287
        %v2307 = vmul.f32 1.0, %v2306
        %v2308 = vrcp.pop %v2288
        %v2309 = vmul.f32 1.0, %v2308
        %v2310 = vrcp.pop %v2289
        %v2311 = vmul.f32 1.0, %v2310
        %v2312 = vrcp.pop %v2290
        %v2313 = vmul.f32 1.0, %v2312
        %v2314 = vrcp.pop %v2291
        %v2315 = vmul.f32 1.0, %v2314
        %v2316 = vrcp.pop %v2292
        %v2317 = vmul.f32 1.0, %v2316
        %v2318 = vrcp.pop %v2293
        %v2319 = vmul.f32 1.0, %v2318
        %v2320 = vrcp.pop %v2294
        %v2321 = vmul.f32 1.0, %v2320
        %v2322 = vrcp.pop %v2295
        %v2323 = vmul.f32 1.0, %v2322
        %s2324 = scalar_lea.vmem %s165, 280 [#allocation6]
        %2325 = vst [vmem:[%s2324] sm:$0xff] %v2297
        %2326 = vst [vmem:[%s2324 + $0x8] sm:$0xff] %v2299
        %2327 = vst [vmem:[%s2324 + $0x10] sm:$0xff] %v2301
        %2328 = vst [vmem:[%s2324 + $0x18] sm:$0xff] %v2303
        %2329 = vst [vmem:[%s2324 + $0x20] sm:$0xff] %v2305
        %2330 = vst [vmem:[%s2324 + $0x28] sm:$0xff] %v2307
        %2331 = vst [vmem:[%s2324 + $0x30] sm:$0xff] %v2309
        %2332 = vst [vmem:[%s2324 + $0x188] sm:$0xff] %v2311
        %2333 = vst [vmem:[%s2324 + $0x190] sm:$0xff] %v2313
        %2334 = vst [vmem:[%s2324 + $0x198] sm:$0xff] %v2315
        %2335 = vst [vmem:[%s2324 + $0x1a0] sm:$0xff] %v2317
        %2336 = vst [vmem:[%s2324 + $0x1a8] sm:$0xff] %v2319
        %2337 = vst [vmem:[%s2324 + $0x1b0] sm:$0xff] %v2321
        %2338 = vst [vmem:[%s2324 + $0x1b8] sm:$0xff] %v2323
        %s2339 = scalar_lea.vmem %s146, 504 [#allocation4]
        %v2340 = vld [vmem:[%s2339] sm:$0xff]
        %v2341 = vld [vmem:[%s2339 + $0x8] sm:$0xff]
        %v2342 = vld [vmem:[%s2339 + $0x10] sm:$0xff]
        %v2343 = vld [vmem:[%s2339 + $0x18] sm:$0xf]
        %v2344 = vld [vmem:[%s2339 + $0x1c] sm:$0xff]
        %v2345 = vld [vmem:[%s2339 + $0x24] sm:$0xff]
        %v2346 = vld [vmem:[%s2339 + $0x2c] sm:$0xff]
        %v2347 = vld [vmem:[%s2339 + $0x34] sm:$0xf]
        %v2348 = vld [vmem:[%s2339 + $0x38] sm:$0xff]
        %v2349 = vld [vmem:[%s2339 + $0x40] sm:$0xff]
        %v2350 = vld [vmem:[%s2339 + $0x48] sm:$0xff]
        %v2351 = vld [vmem:[%s2339 + $0x50] sm:$0xf]
        %s2352 = sadd.s32 %s183, 6
        %s2353 = sld [smem:[#allocation3 + %s2352]]
        %v2354 = vstv %s2353
        %v2367 = vunpack.c.l.b16 %v2340
        %v2368 = vunpack.c.h.b16 %v2340
        %v2369 = vunpack.c.l.b16 %v2341
        %v2370 = vunpack.c.h.b16 %v2341
        %v2371 = vunpack.c.l.b16 %v2342
        %v2372 = vunpack.c.h.b16 %v2342
        %v2373 = vunpack.c.l.b16 %v2343
        %v2374 = vunpack.c.l.b16 %v2344
        %v2375 = vunpack.c.h.b16 %v2344
        %v2376 = vunpack.c.l.b16 %v2345
        %v2377 = vunpack.c.h.b16 %v2345
        %v2378 = vunpack.c.l.b16 %v2346
        %v2379 = vunpack.c.h.b16 %v2346
        %v2380 = vunpack.c.l.b16 %v2347
        %v2381 = vunpack.c.l.b16 %v2348
        %v2382 = vunpack.c.h.b16 %v2348
        %v2383 = vunpack.c.l.b16 %v2349
        %v2384 = vunpack.c.h.b16 %v2349
        %v2385 = vunpack.c.l.b16 %v2350
        %v2386 = vunpack.c.h.b16 %v2350
        %v2387 = vunpack.c.l.b16 %v2351
        %v2388 = vpack.c.b16 %v2374, %v2367
        %v2389 = vpack.c.b16 %v2375, %v2368
        %v2390 = vpack.c.b16 %v2376, %v2369
        %v2391 = vpack.c.b16 %v2377, %v2370
        %v2392 = vpack.c.b16 %v2378, %v2371
        %v2393 = vpack.c.b16 %v2379, %v2372
        %v2394 = vpack.c.b16 %v2380, %v2373
        %v2395 = vpack.c.b16 %v2381, %v2381
        %v2396 = vpack.c.b16 %v2382, %v2382
        %v2397 = vpack.c.b16 %v2383, %v2383
        %v2398 = vpack.c.b16 %v2384, %v2384
        %v2399 = vpack.c.b16 %v2385, %v2385
        %v2400 = vpack.c.b16 %v2386, %v2386
        %v2401 = vpack.c.b16 %v2387, %v2387
        %v2410 = vsel %vm249, %v2395, 0
        %v2413 = vsel %vm249, %v2396, 0
        %v2416 = vsel %vm249, %v2397, 0
        %v2419 = vsel %vm249, %v2398, 0
        %v2422 = vsel %vm249, %v2399, 0
        %v2425 = vsel %vm249, %v2400, 0
        %v2428 = vsel %vm249, %v2401, 0
        %2430 = vmatprep.subr.bf16.mxu0 %v2389
        %2431 = vmatpush1.bf16.msra.mxu0 %v2388
        %2432 = vmatprep.subr.bf16.mxu0 %v2413
        %2433 = vmatpush1.bf16.msra.mxu0 %v2410
        %2434 = vmatprep.subr.bf16.mxu0 0
        %2435 = vmatpush1.bf16.msra.mxu0 0
        %2436 = vmatprep.subr.bf16.mxu0 0
        %2437 = vmatpush1.bf16.msra.mxu0 0
        %2438 = vmatprep.subr.bf16.mxu0 0
        %2439 = vmatpush1.bf16.msra.mxu0 0
        %2440 = vmatprep.subr.bf16.mxu0 0
        %2441 = vmatpush1.bf16.msra.mxu0 0
        %2442 = vmatprep.subr.bf16.mxu0 0
        %2443 = vmatpush1.bf16.msra.mxu0 0
        %2444 = vmatprep.subr.bf16.mxu0 0
        %2445 = vmatpush1.bf16.msra.mxu0 0
        %2446 = vmatprep.subr.bf16.mxu0 0
        %2447 = vmatpush1.bf16.msra.mxu0 0
        %2448 = vmatprep.subr.bf16.mxu0 0
        %2449 = vmatpush1.bf16.msra.mxu0 0
        %2450 = vmatprep.subr.bf16.mxu0 0
        %2451 = vmatpush1.bf16.msra.mxu0 0
        %2452 = vmatprep.subr.bf16.mxu0 0
        %2453 = vmatpush1.bf16.msra.mxu0 0
        %2454 = vmatprep.subr.bf16.mxu0 0
        %2455 = vmatpush1.bf16.msra.mxu0 0
        %2456 = vmatprep.subr.bf16.mxu0 0
        %2457 = vmatpush1.bf16.msra.mxu0 0
        %2458 = vmatprep.subr.bf16.mxu0 0
        %2459 = vmatpush1.bf16.msra.mxu0 0
        %2460 = vmatprep.subr.bf16.mxu0 0
        %2461 = vmatpush1.bf16.msra.mxu0 0
        %2462 = vmatprep.mubr.bf16.mxu0 0
        %2463 = vmatmul.mubr.bf16.gmra.mrb[0].mxu0 %v247
        %v2464 = vpop.f32.mrb[0].mxu0
        %v2465 = vadd.f32 %v2354, %v2464
        %v2466 = vpop.f32.mrb[0].mxu0
        %v2467 = vadd.f32 %v2354, %v2466
        %v2468 = vpop.f32.mrb[0].mxu0
        %v2469 = vadd.f32 %v2354, %v2468
        %v2470 = vpop.f32.mrb[0].mxu0
        %v2471 = vadd.f32 %v2354, %v2470
        %2472 = vdwg.mxu0
        %2473 = vmatprep.subr.bf16.mxu0 %v2391
        %2474 = vmatpush1.bf16.msra.mxu0 %v2390
        %2475 = vmatprep.subr.bf16.mxu0 %v2419
        %2476 = vmatpush1.bf16.msra.mxu0 %v2416
        %2477 = vmatprep.subr.bf16.mxu0 0
        %2478 = vmatpush1.bf16.msra.mxu0 0
        %2479 = vmatprep.subr.bf16.mxu0 0
        %2480 = vmatpush1.bf16.msra.mxu0 0
        %2481 = vmatprep.subr.bf16.mxu0 0
        %2482 = vmatpush1.bf16.msra.mxu0 0
        %2483 = vmatprep.subr.bf16.mxu0 0
        %2484 = vmatpush1.bf16.msra.mxu0 0
        %2485 = vmatprep.subr.bf16.mxu0 0
        %2486 = vmatpush1.bf16.msra.mxu0 0
        %2487 = vmatprep.subr.bf16.mxu0 0
        %2488 = vmatpush1.bf16.msra.mxu0 0
        %2489 = vmatprep.subr.bf16.mxu0 0
        %2490 = vmatpush1.bf16.msra.mxu0 0
        %2491 = vmatprep.subr.bf16.mxu0 0
        %2492 = vmatpush1.bf16.msra.mxu0 0
        %2493 = vmatprep.subr.bf16.mxu0 0
        %2494 = vmatpush1.bf16.msra.mxu0 0
        %2495 = vmatprep.subr.bf16.mxu0 0
        %2496 = vmatpush1.bf16.msra.mxu0 0
        %2497 = vmatprep.subr.bf16.mxu0 0
        %2498 = vmatpush1.bf16.msra.mxu0 0
        %2499 = vmatprep.subr.bf16.mxu0 0
        %2500 = vmatpush1.bf16.msra.mxu0 0
        %2501 = vmatprep.subr.bf16.mxu0 0
        %2502 = vmatpush1.bf16.msra.mxu0 0
        %2503 = vmatprep.subr.bf16.mxu0 0
        %2504 = vmatpush1.bf16.msra.mxu0 0
        %2505 = vmatprep.mubr.bf16.mxu0 0
        %2506 = vmatmul.mubr.bf16.gmra.mrb[0].mxu0 %v247
        %v2507 = vpop.f32.mrb[0].mxu0
        %v2508 = vadd.f32 %v2354, %v2507
        %v2509 = vpop.f32.mrb[0].mxu0
        %v2510 = vadd.f32 %v2354, %v2509
        %v2511 = vpop.f32.mrb[0].mxu0
        %v2512 = vadd.f32 %v2354, %v2511
        %v2513 = vpop.f32.mrb[0].mxu0
        %v2514 = vadd.f32 %v2354, %v2513
        %2515 = vdwg.mxu0
        %2516 = vmatprep.subr.bf16.mxu0 %v2393
        %2517 = vmatpush1.bf16.msra.mxu0 %v2392
        %2518 = vmatprep.subr.bf16.mxu0 %v2425
        %2519 = vmatpush1.bf16.msra.mxu0 %v2422
        %2520 = vmatprep.subr.bf16.mxu0 0
        %2521 = vmatpush1.bf16.msra.mxu0 0
        %2522 = vmatprep.subr.bf16.mxu0 0
        %2523 = vmatpush1.bf16.msra.mxu0 0
        %2524 = vmatprep.subr.bf16.mxu0 0
        %2525 = vmatpush1.bf16.msra.mxu0 0
        %2526 = vmatprep.subr.bf16.mxu0 0
        %2527 = vmatpush1.bf16.msra.mxu0 0
        %2528 = vmatprep.subr.bf16.mxu0 0
        %2529 = vmatpush1.bf16.msra.mxu0 0
        %2530 = vmatprep.subr.bf16.mxu0 0
        %2531 = vmatpush1.bf16.msra.mxu0 0
        %2532 = vmatprep.subr.bf16.mxu0 0
        %2533 = vmatpush1.bf16.msra.mxu0 0
        %2534 = vmatprep.subr.bf16.mxu0 0
        %2535 = vmatpush1.bf16.msra.mxu0 0
        %2536 = vmatprep.subr.bf16.mxu0 0
        %2537 = vmatpush1.bf16.msra.mxu0 0
        %2538 = vmatprep.subr.bf16.mxu0 0
        %2539 = vmatpush1.bf16.msra.mxu0 0
        %2540 = vmatprep.subr.bf16.mxu0 0
        %2541 = vmatpush1.bf16.msra.mxu0 0
        %2542 = vmatprep.subr.bf16.mxu0 0
        %2543 = vmatpush1.bf16.msra.mxu0 0
        %2544 = vmatprep.subr.bf16.mxu0 0
        %2545 = vmatpush1.bf16.msra.mxu0 0
        %2546 = vmatprep.subr.bf16.mxu0 0
        %2547 = vmatpush1.bf16.msra.mxu0 0
        %2548 = vmatprep.mubr.bf16.mxu0 0
        %2549 = vmatmul.mubr.bf16.gmra.mrb[0].mxu0 %v247
        %v2550 = vpop.f32.mrb[0].mxu0
        %v2551 = vadd.f32 %v2354, %v2550
        %v2552 = vpop.f32.mrb[0].mxu0
        %v2553 = vadd.f32 %v2354, %v2552
        %v2554 = vpop.f32.mrb[0].mxu0
        %v2555 = vadd.f32 %v2354, %v2554
        %v2556 = vpop.f32.mrb[0].mxu0
        %v2557 = vadd.f32 %v2354, %v2556
        %2558 = vdwg.mxu0
        %2559 = vmatprep.subr.bf16.mxu0 0
        %2560 = vmatpush1.bf16.msra.mxu0 %v2394
        %2561 = vmatprep.subr.bf16.mxu0 0
        %2562 = vmatpush1.bf16.msra.mxu0 %v2428
        %2563 = vmatprep.subr.bf16.mxu0 0
        %2564 = vmatpush1.bf16.msra.mxu0 0
        %2565 = vmatprep.subr.bf16.mxu0 0
        %2566 = vmatpush1.bf16.msra.mxu0 0
        %2567 = vmatprep.subr.bf16.mxu0 0
        %2568 = vmatpush1.bf16.msra.mxu0 0
        %2569 = vmatprep.subr.bf16.mxu0 0
        %2570 = vmatpush1.bf16.msra.mxu0 0
        %2571 = vmatprep.subr.bf16.mxu0 0
        %2572 = vmatpush1.bf16.msra.mxu0 0
        %2573 = vmatprep.subr.bf16.mxu0 0
        %2574 = vmatpush1.bf16.msra.mxu0 0
        %2575 = vmatprep.subr.bf16.mxu0 0
        %2576 = vmatpush1.bf16.msra.mxu0 0
        %2577 = vmatprep.subr.bf16.mxu0 0
        %2578 = vmatpush1.bf16.msra.mxu0 0
        %2579 = vmatprep.subr.bf16.mxu0 0
        %2580 = vmatpush1.bf16.msra.mxu0 0
        %2581 = vmatprep.subr.bf16.mxu0 0
        %2582 = vmatpush1.bf16.msra.mxu0 0
        %2583 = vmatprep.subr.bf16.mxu0 0
        %2584 = vmatpush1.bf16.msra.mxu0 0
        %2585 = vmatprep.subr.bf16.mxu0 0
        %2586 = vmatpush1.bf16.msra.mxu0 0
        %2587 = vmatprep.subr.bf16.mxu0 0
        %2588 = vmatpush1.bf16.msra.mxu0 0
        %2589 = vmatprep.subr.bf16.mxu0 0
        %2590 = vmatpush1.bf16.msra.mxu0 0
        %2591 = vmatprep.mubr.bf16.mxu0 0
        %2592 = vmatmul.mubr.bf16.gmra.mrb[0].mxu0 %v247
        %v2593 = vpop.f32.mrb[0].mxu0
        %v2594 = vadd.f32 %v2354, %v2593
        %v2595 = vpop.f32.mrb[0].mxu0
        %v2596 = vpop.f32.mrb[0].mxu0
        %v2597 = vadd.f32 %v2354, %v2596
        %v2598 = vpop.f32.mrb[0].mxu0
        %2599 = vdwg.mxu0
        %v2600 = vxor.u32 %v2465, 2147483648
        %v2601 = vxor.u32 %v2467, 2147483648
        %v2602 = vxor.u32 %v2508, 2147483648
        %v2603 = vxor.u32 %v2510, 2147483648
        %v2604 = vxor.u32 %v2551, 2147483648
        %v2605 = vxor.u32 %v2553, 2147483648
        %v2606 = vxor.u32 %v2594, 2147483648
        %v2607 = vxor.u32 %v2469, 2147483648
        %v2608 = vxor.u32 %v2471, 2147483648
        %v2609 = vxor.u32 %v2512, 2147483648
        %v2610 = vxor.u32 %v2514, 2147483648
        %v2611 = vxor.u32 %v2555, 2147483648
        %v2612 = vxor.u32 %v2557, 2147483648
        %v2613 = vxor.u32 %v2597, 2147483648
        %v2614 = vmul.f32 %v2600, 1.442695
        %v2615 = vpow.pop %v2614
        %v2616 = vmul.f32 %v2601, 1.442695
        %v2617 = vpow.pop %v2616
        %v2618 = vmul.f32 %v2602, 1.442695
        %v2619 = vpow.pop %v2618
        %v2620 = vmul.f32 %v2603, 1.442695
        %v2621 = vpow.pop %v2620
        %v2622 = vmul.f32 %v2604, 1.442695
        %v2623 = vpow.pop %v2622
        %v2624 = vmul.f32 %v2605, 1.442695
        %v2625 = vpow.pop %v2624
        %v2626 = vmul.f32 %v2606, 1.442695
        %v2627 = vpow.pop %v2626
        %v2628 = vmul.f32 %v2607, 1.442695
        %v2629 = vpow.pop %v2628
        %v2630 = vmul.f32 %v2608, 1.442695
        %v2631 = vpow.pop %v2630
        %v2632 = vmul.f32 %v2609, 1.442695
        %v2633 = vpow.pop %v2632
        %v2634 = vmul.f32 %v2610, 1.442695
        %v2635 = vpow.pop %v2634
        %v2636 = vmul.f32 %v2611, 1.442695
        %v2637 = vpow.pop %v2636
        %v2638 = vmul.f32 %v2612, 1.442695
        %v2639 = vpow.pop %v2638
        %v2640 = vmul.f32 %v2613, 1.442695
        %v2641 = vpow.pop %v2640
        %v2642 = vadd.f32 %v2615, 1.0
        %v2643 = vadd.f32 %v2617, 1.0
        %v2644 = vadd.f32 %v2619, 1.0
        %v2645 = vadd.f32 %v2621, 1.0
        %v2646 = vadd.f32 %v2623, 1.0
        %v2647 = vadd.f32 %v2625, 1.0
        %v2648 = vadd.f32 %v2627, 1.0
        %v2649 = vadd.f32 %v2629, 1.0
        %v2650 = vadd.f32 %v2631, 1.0
        %v2651 = vadd.f32 %v2633, 1.0
        %v2652 = vadd.f32 %v2635, 1.0
        %v2653 = vadd.f32 %v2637, 1.0
        %v2654 = vadd.f32 %v2639, 1.0
        %v2655 = vadd.f32 %v2641, 1.0
        %v2656 = vrcp.pop %v2642
        %v2657 = vmul.f32 1.0, %v2656
        %v2658 = vrcp.pop %v2643
        %v2659 = vmul.f32 1.0, %v2658
        %v2660 = vrcp.pop %v2644
        %v2661 = vmul.f32 1.0, %v2660
        %v2662 = vrcp.pop %v2645
        %v2663 = vmul.f32 1.0, %v2662
        %v2664 = vrcp.pop %v2646
        %v2665 = vmul.f32 1.0, %v2664
        %v2666 = vrcp.pop %v2647
        %v2667 = vmul.f32 1.0, %v2666
        %v2668 = vrcp.pop %v2648
        %v2669 = vmul.f32 1.0, %v2668
        %v2670 = vrcp.pop %v2649
        %v2671 = vmul.f32 1.0, %v2670
        %v2672 = vrcp.pop %v2650
        %v2673 = vmul.f32 1.0, %v2672
        %v2674 = vrcp.pop %v2651
        %v2675 = vmul.f32 1.0, %v2674
        %v2676 = vrcp.pop %v2652
        %v2677 = vmul.f32 1.0, %v2676
        %v2678 = vrcp.pop %v2653
        %v2679 = vmul.f32 1.0, %v2678
        %v2680 = vrcp.pop %v2654
        %v2681 = vmul.f32 1.0, %v2680
        %v2682 = vrcp.pop %v2655
        %v2683 = vmul.f32 1.0, %v2682
        %s2684 = scalar_lea.vmem %s165, 336 [#allocation6]
        %2685 = vst [vmem:[%s2684] sm:$0xff] %v2657
        %2686 = vst [vmem:[%s2684 + $0x8] sm:$0xff] %v2659
        %2687 = vst [vmem:[%s2684 + $0x10] sm:$0xff] %v2661
        %2688 = vst [vmem:[%s2684 + $0x18] sm:$0xff] %v2663
        %2689 = vst [vmem:[%s2684 + $0x20] sm:$0xff] %v2665
        %2690 = vst [vmem:[%s2684 + $0x28] sm:$0xff] %v2667
        %2691 = vst [vmem:[%s2684 + $0x30] sm:$0xff] %v2669
        %2692 = vst [vmem:[%s2684 + $0x188] sm:$0xff] %v2671
        %2693 = vst [vmem:[%s2684 + $0x190] sm:$0xff] %v2673
        %2694 = vst [vmem:[%s2684 + $0x198] sm:$0xff] %v2675
        %2695 = vst [vmem:[%s2684 + $0x1a0] sm:$0xff] %v2677
        %2696 = vst [vmem:[%s2684 + $0x1a8] sm:$0xff] %v2679
        %2697 = vst [vmem:[%s2684 + $0x1b0] sm:$0xff] %v2681
        %2698 = vst [vmem:[%s2684 + $0x1b8] sm:$0xff] %v2683
        %s2699 = sand.u32 %s78, 1
        %s2700 = sand.u32 %s78, 1
        %s2701 = smul.addr %s2700, 784
        %s2702 = scalar_lea.vmem [#allocation6], %s2701
        // Predicated region
        $region33: #{model_forward.1} parent=27 // pred_check
          %p2703 = pneg %p88
        $region34: #{model_forward.1} parent=27 // pred_check_branch
          %2705 = sbr.rel (%p2703) target = $region36
        $region35: #{model_forward.1} parent=27 // pred_region
          %s2706 = smul.u32 7, %s23
          %s2707 = smul.addr %s2706, 7
          %s2708 = smul.addr %s2707, 8
          %s2709 = scalar_lea.vmem %s3, %s2708
          // Predicated region
          $region37: #{model_forward.1} parent=35 // pred_check
            _
          $region38: #{model_forward.1} parent=35 // pred_check_branch
            %2711 = sbr.rel (0) target = $region40
          $region39: #{model_forward.1} parent=35 // pred_region
            // Predicated region
            $region41: #{model_forward.1} parent=39 // pred_check
              _
            $region42: #{model_forward.1} parent=39 // pred_check_branch
              %2713 = sbr.rel (0) target = $region44
            $region43: #{model_forward.1} parent=39 // pred_region
              loop: start=0, step=1, limit=1
              $region45: #{model_forward.1} parent=43 // loop_pre_header
                _
              $region46: #{model_forward.1} parent=43 // loop_header
                %s2715 = sphi 0, %s2719
                %p2716 = scmp.ge.s32.totalorder %s2715, 1
                %s2720 = sphi %s2702, %s2702
                %s2721 = sphi %s2709, %s2709
              $region47: #{model_forward.1} parent=43 // loop_header_branch
                %2718 = sbr.rel (%p2716) target = $region51
              $region48: #{model_forward.1} parent=43 // loop_body
                %v2722 = vld [vmem:[%s2720] sm:$0xff]
                %2723 = vst [vmem:[%s2721] sm:$0xff] %v2722
                %v2724 = vld [vmem:[%s2720 + $0x8] sm:$0xff]
                %2725 = vst [vmem:[%s2721 + $0x8] sm:$0xff] %v2724
                %v2726 = vld [vmem:[%s2720 + $0x10] sm:$0xff]
                %2727 = vst [vmem:[%s2721 + $0x10] sm:$0xff] %v2726
                %v2728 = vld [vmem:[%s2720 + $0x18] sm:$0xff]
                %2729 = vst [vmem:[%s2721 + $0x18] sm:$0xff] %v2728
                %v2730 = vld [vmem:[%s2720 + $0x20] sm:$0xff]
                %2731 = vst [vmem:[%s2721 + $0x20] sm:$0xff] %v2730
                %v2732 = vld [vmem:[%s2720 + $0x28] sm:$0xff]
                %2733 = vst [vmem:[%s2721 + $0x28] sm:$0xff] %v2732
                %v2734 = vld [vmem:[%s2720 + $0x30] sm:$0xff]
                %2735 = vst [vmem:[%s2721 + $0x30] sm:$0xff] %v2734
                %v2736 = vld [vmem:[%s2720 + $0x38] sm:$0xff]
                %2737 = vst [vmem:[%s2721 + $0x38] sm:$0xff] %v2736
                %v2738 = vld [vmem:[%s2720 + $0x40] sm:$0xff]
                %2739 = vst [vmem:[%s2721 + $0x40] sm:$0xff] %v2738
                %v2740 = vld [vmem:[%s2720 + $0x48] sm:$0xff]
                %2741 = vst [vmem:[%s2721 + $0x48] sm:$0xff] %v2740
                %v2742 = vld [vmem:[%s2720 + $0x50] sm:$0xff]
                %2743 = vst [vmem:[%s2721 + $0x50] sm:$0xff] %v2742
                %v2744 = vld [vmem:[%s2720 + $0x58] sm:$0xff]
                %2745 = vst [vmem:[%s2721 + $0x58] sm:$0xff] %v2744
                %v2746 = vld [vmem:[%s2720 + $0x60] sm:$0xff]
                %2747 = vst [vmem:[%s2721 + $0x60] sm:$0xff] %v2746
                %v2748 = vld [vmem:[%s2720 + $0x68] sm:$0xff]
                %2749 = vst [vmem:[%s2721 + $0x68] sm:$0xff] %v2748
                %v2750 = vld [vmem:[%s2720 + $0x70] sm:$0xff]
                %2751 = vst [vmem:[%s2721 + $0x70] sm:$0xff] %v2750
                %v2752 = vld [vmem:[%s2720 + $0x78] sm:$0xff]
                %2753 = vst [vmem:[%s2721 + $0x78] sm:$0xff] %v2752
                %v2754 = vld [vmem:[%s2720 + $0x80] sm:$0xff]
                %2755 = vst [vmem:[%s2721 + $0x80] sm:$0xff] %v2754
                %v2756 = vld [vmem:[%s2720 + $0x88] sm:$0xff]
                %2757 = vst [vmem:[%s2721 + $0x88] sm:$0xff] %v2756
                %v2758 = vld [vmem:[%s2720 + $0x90] sm:$0xff]
                %2759 = vst [vmem:[%s2721 + $0x90] sm:$0xff] %v2758
                %v2760 = vld [vmem:[%s2720 + $0x98] sm:$0xff]
                %2761 = vst [vmem:[%s2721 + $0x98] sm:$0xff] %v2760
                %v2762 = vld [vmem:[%s2720 + $0xa0] sm:$0xff]
                %2763 = vst [vmem:[%s2721 + $0xa0] sm:$0xff] %v2762
                %v2764 = vld [vmem:[%s2720 + $0xa8] sm:$0xff]
                %2765 = vst [vmem:[%s2721 + $0xa8] sm:$0xff] %v2764
                %v2766 = vld [vmem:[%s2720 + $0xb0] sm:$0xff]
                %2767 = vst [vmem:[%s2721 + $0xb0] sm:$0xff] %v2766
                %v2768 = vld [vmem:[%s2720 + $0xb8] sm:$0xff]
                %2769 = vst [vmem:[%s2721 + $0xb8] sm:$0xff] %v2768
                %v2770 = vld [vmem:[%s2720 + $0xc0] sm:$0xff]
                %2771 = vst [vmem:[%s2721 + $0xc0] sm:$0xff] %v2770
                %v2772 = vld [vmem:[%s2720 + $0xc8] sm:$0xff]
                %2773 = vst [vmem:[%s2721 + $0xc8] sm:$0xff] %v2772
                %v2774 = vld [vmem:[%s2720 + $0xd0] sm:$0xff]
                %2775 = vst [vmem:[%s2721 + $0xd0] sm:$0xff] %v2774
                %v2776 = vld [vmem:[%s2720 + $0xd8] sm:$0xff]
                %2777 = vst [vmem:[%s2721 + $0xd8] sm:$0xff] %v2776
                %v2778 = vld [vmem:[%s2720 + $0xe0] sm:$0xff]
                %2779 = vst [vmem:[%s2721 + $0xe0] sm:$0xff] %v2778
                %v2780 = vld [vmem:[%s2720 + $0xe8] sm:$0xff]
                %2781 = vst [vmem:[%s2721 + $0xe8] sm:$0xff] %v2780
                %v2782 = vld [vmem:[%s2720 + $0xf0] sm:$0xff]
                %2783 = vst [vmem:[%s2721 + $0xf0] sm:$0xff] %v2782
                %v2784 = vld [vmem:[%s2720 + $0xf8] sm:$0xff]
                %2785 = vst [vmem:[%s2721 + $0xf8] sm:$0xff] %v2784
                %v2786 = vld [vmem:[%s2720 + $0x100] sm:$0xff]
                %2787 = vst [vmem:[%s2721 + $0x100] sm:$0xff] %v2786
                %v2788 = vld [vmem:[%s2720 + $0x108] sm:$0xff]
                %2789 = vst [vmem:[%s2721 + $0x108] sm:$0xff] %v2788
                %v2790 = vld [vmem:[%s2720 + $0x110] sm:$0xff]
                %2791 = vst [vmem:[%s2721 + $0x110] sm:$0xff] %v2790
                %v2792 = vld [vmem:[%s2720 + $0x118] sm:$0xff]
                %2793 = vst [vmem:[%s2721 + $0x118] sm:$0xff] %v2792
                %v2794 = vld [vmem:[%s2720 + $0x120] sm:$0xff]
                %2795 = vst [vmem:[%s2721 + $0x120] sm:$0xff] %v2794
                %v2796 = vld [vmem:[%s2720 + $0x128] sm:$0xff]
                %2797 = vst [vmem:[%s2721 + $0x128] sm:$0xff] %v2796
                %v2798 = vld [vmem:[%s2720 + $0x130] sm:$0xff]
                %2799 = vst [vmem:[%s2721 + $0x130] sm:$0xff] %v2798
                %v2800 = vld [vmem:[%s2720 + $0x138] sm:$0xff]
                %2801 = vst [vmem:[%s2721 + $0x138] sm:$0xff] %v2800
                %v2802 = vld [vmem:[%s2720 + $0x140] sm:$0xff]
                %2803 = vst [vmem:[%s2721 + $0x140] sm:$0xff] %v2802
                %v2804 = vld [vmem:[%s2720 + $0x148] sm:$0xff]
                %2805 = vst [vmem:[%s2721 + $0x148] sm:$0xff] %v2804
                %v2806 = vld [vmem:[%s2720 + $0x150] sm:$0xff]
                %2807 = vst [vmem:[%s2721 + $0x150] sm:$0xff] %v2806
                %v2808 = vld [vmem:[%s2720 + $0x158] sm:$0xff]
                %2809 = vst [vmem:[%s2721 + $0x158] sm:$0xff] %v2808
                %v2810 = vld [vmem:[%s2720 + $0x160] sm:$0xff]
                %2811 = vst [vmem:[%s2721 + $0x160] sm:$0xff] %v2810
                %v2812 = vld [vmem:[%s2720 + $0x168] sm:$0xff]
                %2813 = vst [vmem:[%s2721 + $0x168] sm:$0xff] %v2812
                %v2814 = vld [vmem:[%s2720 + $0x170] sm:$0xff]
                %2815 = vst [vmem:[%s2721 + $0x170] sm:$0xff] %v2814
                %v2816 = vld [vmem:[%s2720 + $0x178] sm:$0xff]
                %2817 = vst [vmem:[%s2721 + $0x178] sm:$0xff] %v2816
                %v2818 = vld [vmem:[%s2720 + $0x180] sm:$0xff]
                %2819 = vst [vmem:[%s2721 + $0x180] sm:$0xff] %v2818
                %v2820 = vld [vmem:[%s2720 + $0x188] sm:$0xff]
                %2821 = vst [vmem:[%s2721 + $0x310] sm:$0xff] %v2820
                %v2822 = vld [vmem:[%s2720 + $0x190] sm:$0xff]
                %2823 = vst [vmem:[%s2721 + $0x318] sm:$0xff] %v2822
                %v2824 = vld [vmem:[%s2720 + $0x198] sm:$0xff]
                %2825 = vst [vmem:[%s2721 + $0x320] sm:$0xff] %v2824
                %v2826 = vld [vmem:[%s2720 + $0x1a0] sm:$0xff]
                %2827 = vst [vmem:[%s2721 + $0x328] sm:$0xff] %v2826
                %v2828 = vld [vmem:[%s2720 + $0x1a8] sm:$0xff]
                %2829 = vst [vmem:[%s2721 + $0x330] sm:$0xff] %v2828
                %v2830 = vld [vmem:[%s2720 + $0x1b0] sm:$0xff]
                %2831 = vst [vmem:[%s2721 + $0x338] sm:$0xff] %v2830
                %v2832 = vld [vmem:[%s2720 + $0x1b8] sm:$0xff]
                %2833 = vst [vmem:[%s2721 + $0x340] sm:$0xff] %v2832
                %v2834 = vld [vmem:[%s2720 + $0x1c0] sm:$0xff]
                %2835 = vst [vmem:[%s2721 + $0x348] sm:$0xff] %v2834
                %v2836 = vld [vmem:[%s2720 + $0x1c8] sm:$0xff]
                %2837 = vst [vmem:[%s2721 + $0x350] sm:$0xff] %v2836
                %v2838 = vld [vmem:[%s2720 + $0x1d0] sm:$0xff]
                %2839 = vst [vmem:[%s2721 + $0x358] sm:$0xff] %v2838
                %v2840 = vld [vmem:[%s2720 + $0x1d8] sm:$0xff]
                %2841 = vst [vmem:[%s2721 + $0x360] sm:$0xff] %v2840
                %v2842 = vld [vmem:[%s2720 + $0x1e0] sm:$0xff]
                %2843 = vst [vmem:[%s2721 + $0x368] sm:$0xff] %v2842
                %v2844 = vld [vmem:[%s2720 + $0x1e8] sm:$0xff]
                %2845 = vst [vmem:[%s2721 + $0x370] sm:$0xff] %v2844
                %v2846 = vld [vmem:[%s2720 + $0x1f0] sm:$0xff]
                %2847 = vst [vmem:[%s2721 + $0x378] sm:$0xff] %v2846
                %v2848 = vld [vmem:[%s2720 + $0x1f8] sm:$0xff]
                %2849 = vst [vmem:[%s2721 + $0x380] sm:$0xff] %v2848
                %v2850 = vld [vmem:[%s2720 + $0x200] sm:$0xff]
                %2851 = vst [vmem:[%s2721 + $0x388] sm:$0xff] %v2850
                %v2852 = vld [vmem:[%s2720 + $0x208] sm:$0xff]
                %2853 = vst [vmem:[%s2721 + $0x390] sm:$0xff] %v2852
                %v2854 = vld [vmem:[%s2720 + $0x210] sm:$0xff]
                %2855 = vst [vmem:[%s2721 + $0x398] sm:$0xff] %v2854
                %v2856 = vld [vmem:[%s2720 + $0x218] sm:$0xff]
                %2857 = vst [vmem:[%s2721 + $0x3a0] sm:$0xff] %v2856
                %v2858 = vld [vmem:[%s2720 + $0x220] sm:$0xff]
                %2859 = vst [vmem:[%s2721 + $0x3a8] sm:$0xff] %v2858
                %v2860 = vld [vmem:[%s2720 + $0x228] sm:$0xff]
                %2861 = vst [vmem:[%s2721 + $0x3b0] sm:$0xff] %v2860
                %v2862 = vld [vmem:[%s2720 + $0x230] sm:$0xff]
                %2863 = vst [vmem:[%s2721 + $0x3b8] sm:$0xff] %v2862
                %v2864 = vld [vmem:[%s2720 + $0x238] sm:$0xff]
                %2865 = vst [vmem:[%s2721 + $0x3c0] sm:$0xff] %v2864
                %v2866 = vld [vmem:[%s2720 + $0x240] sm:$0xff]
                %2867 = vst [vmem:[%s2721 + $0x3c8] sm:$0xff] %v2866
                %v2868 = vld [vmem:[%s2720 + $0x248] sm:$0xff]
                %2869 = vst [vmem:[%s2721 + $0x3d0] sm:$0xff] %v2868
                %v2870 = vld [vmem:[%s2720 + $0x250] sm:$0xff]
                %2871 = vst [vmem:[%s2721 + $0x3d8] sm:$0xff] %v2870
                %v2872 = vld [vmem:[%s2720 + $0x258] sm:$0xff]
                %2873 = vst [vmem:[%s2721 + $0x3e0] sm:$0xff] %v2872
                %v2874 = vld [vmem:[%s2720 + $0x260] sm:$0xff]
                %2875 = vst [vmem:[%s2721 + $0x3e8] sm:$0xff] %v2874
                %v2876 = vld [vmem:[%s2720 + $0x268] sm:$0xff]
                %2877 = vst [vmem:[%s2721 + $0x3f0] sm:$0xff] %v2876
                %v2878 = vld [vmem:[%s2720 + $0x270] sm:$0xff]
                %2879 = vst [vmem:[%s2721 + $0x3f8] sm:$0xff] %v2878
                %v2880 = vld [vmem:[%s2720 + $0x278] sm:$0xff]
                %2881 = vst [vmem:[%s2721 + $0x400] sm:$0xff] %v2880
                %v2882 = vld [vmem:[%s2720 + $0x280] sm:$0xff]
                %2883 = vst [vmem:[%s2721 + $0x408] sm:$0xff] %v2882
                %v2884 = vld [vmem:[%s2720 + $0x288] sm:$0xff]
                %2885 = vst [vmem:[%s2721 + $0x410] sm:$0xff] %v2884
                %v2886 = vld [vmem:[%s2720 + $0x290] sm:$0xff]
                %2887 = vst [vmem:[%s2721 + $0x418] sm:$0xff] %v2886
                %v2888 = vld [vmem:[%s2720 + $0x298] sm:$0xff]
                %2889 = vst [vmem:[%s2721 + $0x420] sm:$0xff] %v2888
                %v2890 = vld [vmem:[%s2720 + $0x2a0] sm:$0xff]
                %2891 = vst [vmem:[%s2721 + $0x428] sm:$0xff] %v2890
                %v2892 = vld [vmem:[%s2720 + $0x2a8] sm:$0xff]
                %2893 = vst [vmem:[%s2721 + $0x430] sm:$0xff] %v2892
                %v2894 = vld [vmem:[%s2720 + $0x2b0] sm:$0xff]
                %2895 = vst [vmem:[%s2721 + $0x438] sm:$0xff] %v2894
                %v2896 = vld [vmem:[%s2720 + $0x2b8] sm:$0xff]
                %2897 = vst [vmem:[%s2721 + $0x440] sm:$0xff] %v2896
                %v2898 = vld [vmem:[%s2720 + $0x2c0] sm:$0xff]
                %2899 = vst [vmem:[%s2721 + $0x448] sm:$0xff] %v2898
                %v2900 = vld [vmem:[%s2720 + $0x2c8] sm:$0xff]
                %2901 = vst [vmem:[%s2721 + $0x450] sm:$0xff] %v2900
                %v2902 = vld [vmem:[%s2720 + $0x2d0] sm:$0xff]
                %2903 = vst [vmem:[%s2721 + $0x458] sm:$0xff] %v2902
                %v2904 = vld [vmem:[%s2720 + $0x2d8] sm:$0xff]
                %2905 = vst [vmem:[%s2721 + $0x460] sm:$0xff] %v2904
                %v2906 = vld [vmem:[%s2720 + $0x2e0] sm:$0xff]
                %2907 = vst [vmem:[%s2721 + $0x468] sm:$0xff] %v2906
                %v2908 = vld [vmem:[%s2720 + $0x2e8] sm:$0xff]
                %2909 = vst [vmem:[%s2721 + $0x470] sm:$0xff] %v2908
                %v2910 = vld [vmem:[%s2720 + $0x2f0] sm:$0xff]
                %2911 = vst [vmem:[%s2721 + $0x478] sm:$0xff] %v2910
                %v2912 = vld [vmem:[%s2720 + $0x2f8] sm:$0xff]
                %2913 = vst [vmem:[%s2721 + $0x480] sm:$0xff] %v2912
                %v2914 = vld [vmem:[%s2720 + $0x300] sm:$0xff]
                %2915 = vst [vmem:[%s2721 + $0x488] sm:$0xff] %v2914
                %v2916 = vld [vmem:[%s2720 + $0x308] sm:$0xff]
                %2917 = vst [vmem:[%s2721 + $0x490] sm:$0xff] %v2916
              $region49: #{model_forward.1} parent=43 // loop_footer
                %s2719 = sadd.s32 1, %s2715
              $region50: #{model_forward.1} parent=43 // loop_footer_branch
                %2714 = sbr.rel target = $region46
              $region51: #{model_forward.1} parent=43 // loop_exit
                _
            $region44: #{model_forward.1} parent=39 // pred_fallthru
              _
            // Predicated region
            $region52: #{model_forward.1} parent=39 // pred_check
              _
            $region53: #{model_forward.1} parent=39 // pred_check_branch
              %2919 = sbr.rel target = $region55
            $region54: #{model_forward.1} parent=39 // pred_region
              _
            $region55: #{model_forward.1} parent=39 // pred_fallthru
              _
          $region40: #{model_forward.1} parent=35 // pred_fallthru
            _
          %2920 = vnop
        $region36: #{model_forward.1} parent=27 // pred_fallthru
          _
      $region28: #{model_forward.1} parent=5 // pred_fallthru
        _
      %p2921 = scmp.le.s32.totalorder 2, %s18
      // Predicated region
      $region56: #{model_forward.1} parent=5 // pred_check
        %p2922 = pneg %p2921
      $region57: #{model_forward.1} parent=5 // pred_check_branch
        %2924 = sbr.rel (%p2922) target = $region59
      $region58: #{model_forward.1} parent=5 // pred_region
        %s2925 = ssub.s32 %s18, 2
        // Predicated region
        $region60: #{model_forward.1} parent=58 // pred_check
          %p2926 = pneg %p94
        $region61: #{model_forward.1} parent=58 // pred_check_branch
          %2928 = sbr.rel (%p2926) target = $region63
        $region62: #{model_forward.1} parent=58 // pred_region
          %s2929 = sand.u32 %s79, 1
          %s2930 = sand.u32 %s79, 1
          %s2931 = smul.addr %s2930, 784
          %s2932 = scalar_lea.vmem [#allocation6], %s2931
        $region63: #{model_forward.1} parent=58 // pred_fallthru
          _
      $region59: #{model_forward.1} parent=5 // pred_fallthru
        _
    $region6: #{model_forward.1} parent=1 // loop_footer
      %s22 = sadd.s32 1, %s18
    $region7: #{model_forward.1} parent=1 // loop_footer_branch
      %17 = sbr.rel target = $region3
    $region8: #{model_forward.1} parent=1 // loop_exit
      _
    %2933 = vsyncpa [#allocation5], 1
    %s2934 = scalar_lea.sflag [#allocation5], 1
    %2935 = vsyncpa %s2934, 1

</llo_original>
